<compile_context>
chip_gen: v6e
topology: v6e:2x2x1
jax: 0.10.0
libtpu: 0.0.40
codegen_flags: <defaults>
</compile_context>

<pallas_src>
import functools

import jax
import jax.numpy as jnp
from jax.experimental import pallas as pl
from jax.experimental.pallas import tpu as pltpu


_VMEM_LIMIT = 48 * 1024 * 1024  # headroom below v7x's 64 MiB physical VMEM
_LN_EPS = 1e-5                  # torch.nn.LayerNorm default


# ------------------------------ tile helpers -------------------------------

def _row_tile(full, desired=256, align=8):
    """Pick a row (sublane) tile: multiple of `align` dividing `full`, or full."""
    if full <= desired:
        return full
    t = (desired // align) * align
    while t >= align:
        if full % t == 0:
            return t
        t -= align
    return full


def _col_tile(full, desired=512, align=128):
    """Pick a lane tile: multiple of 128 dividing `full`, or the full dim."""
    if full <= desired:
        return full
    t = (desired // align) * align
    while t >= align:
        if full % t == 0:
            return t
        t -= align
    return full


# ----------------------------- Pallas kernels ------------------------------

def _ln_matmul_kernel(x_ref, g_ref, b_ref, w_ref, o_ref, ln_scr):
    """out = LayerNorm(x) @ W  (no bias). x:(tm,D) g,b:(1,D) W:(D,tf).

    The LN result is computed once per row tile (at feature-tile index 0)
    into VMEM scratch and reused across all feature tiles.
    """
    @pl.when(pl.program_id(1) == 0)
    def _compute_ln():
        x = x_ref[...].astype(jnp.float32)
        mu = jnp.mean(x, axis=-1, keepdims=True)
        var = jnp.mean(jnp.square(x - mu), axis=-1, keepdims=True)
        h = (x - mu) * jax.lax.rsqrt(var + _LN_EPS)
        ln_scr[...] = h * g_ref[...] + b_ref[...]

    o_ref[...] = jnp.dot(ln_scr[...], w_ref[...],
                         preferred_element_type=jnp.float32).astype(o_ref.dtype)


def ln_matmul(x2d, gamma, beta, w):
    """Fused LayerNorm + (bias-free) matmul, tiled over rows and out-features."""
    N, D = x2d.shape
    F = w.shape[1]
    tm = _row_tile(N)
    tf = _col_tile(F)
    grid = (N // tm, F // tf)
    return pl.pallas_call(
        _ln_matmul_kernel,
        out_shape=jax.ShapeDtypeStruct((N, F), x2d.dtype),
        grid=grid,
        in_specs=[pl.BlockSpec((tm, D), lambda i, j: (i, 0)),
                  pl.BlockSpec((1, D), lambda i, j: (0, 0)),
                  pl.BlockSpec((1, D), lambda i, j: (0, 0)),
                  pl.BlockSpec((D, tf), lambda i, j: (0, j))],
        out_specs=pl.BlockSpec((tm, tf), lambda i, j: (i, j)),
        scratch_shapes=[pltpu.VMEM((tm, D), jnp.float32)],   # cached LN result
        compiler_params=pltpu.CompilerParams(
            dimension_semantics=("parallel", "arbitrary"),
            vmem_limit_bytes=_VMEM_LIMIT),
    )(x2d, gamma.reshape(1, D), beta.reshape(1, D), w)


def _attn_proj_kernel(qkv_ref, m_ref, x_ref, wo_ref, bo_ref, o_ref, *, n_heads):
    """Causal multi-head attention + output projection + residual, per batch."""
    S, three_d = qkv_ref.shape
    D = three_d // 3
    Dh = D // n_heads
    qkv = qkv_ref[...].astype(jnp.float32)                       # (S, 3D)
    scale = 1.0 / jnp.sqrt(jnp.float32(Dh))
    q_all = qkv[:, :D] * scale                                   # fold scale into Q once
    k_all = qkv[:, D:2 * D]
    v_all = qkv[:, 2 * D:]

    key_keep = m_ref[...] > 0.5                                  # (1, S) pad mask
    row = jax.lax.broadcasted_iota(jnp.int32, (S, S), 0)
    col = jax.lax.broadcasted_iota(jnp.int32, (S, S), 1)
    keep = jnp.logical_and(col <= row, key_keep)                 # (S, S)
    neg_bias = jnp.where(keep, 0.0, -1e30)                       # additive mask, once

    heads = []
    for h in range(n_heads):
        q = q_all[:, h * Dh:(h + 1) * Dh]
        k = k_all[:, h * Dh:(h + 1) * Dh]
        v = v_all[:, h * Dh:(h + 1) * Dh]
        # contract over Dh directly (no k.T transpose through the XLU)
        s = jax.lax.dot_general(q, k, (((1,), (1,)), ((), ())),
                                preferred_element_type=jnp.float32) + neg_bias
        s_max = jnp.max(s, axis=-1, keepdims=True)
        p = jnp.exp(s - s_max)
        p = p * pl.reciprocal(jnp.sum(p, axis=-1, keepdims=True), approx=True)
        heads.append(jnp.dot(p, v, preferred_element_type=jnp.float32))
    ctx = jnp.concatenate(heads, axis=-1)                        # (S, D)

    out = jnp.dot(ctx, wo_ref[...], preferred_element_type=jnp.float32) + bo_ref[...]
    o_ref[...] = (x_ref[...].astype(jnp.float32) + out).astype(o_ref.dtype)


def attention_block(qkv, mask3, x_resid, wo, bo, *, n_heads):
    """qkv:(B,S,3D) mask3:(B,1,S) x_resid:(B,S,D) -> (B,S,D)."""
    B, S, three_d = qkv.shape
    D = three_d // 3
    kernel = functools.partial(_attn_proj_kernel, n_heads=n_heads)
    return pl.pallas_call(
        kernel,
        out_shape=jax.ShapeDtypeStruct((B, S, D), x_resid.dtype),
        grid=(B,),
        in_specs=[pl.BlockSpec((None, S, three_d), lambda b: (b, 0, 0)),
                  pl.BlockSpec((None, 1, S), lambda b: (b, 0, 0)),
                  pl.BlockSpec((None, S, D), lambda b: (b, 0, 0)),
                  pl.BlockSpec((D, D), lambda b: (0, 0)),
                  pl.BlockSpec((1, D), lambda b: (0, 0))],
        out_specs=pl.BlockSpec((None, S, D), lambda b: (b, 0, 0)),
        compiler_params=pltpu.CompilerParams(
            dimension_semantics=("parallel",),
            vmem_limit_bytes=_VMEM_LIMIT),
    )(qkv, mask3, x_resid, wo, bo.reshape(1, D))


def _ln_geglu_kernel(x_ref, g_ref, b_ref, w1_ref, b1_ref, w2_ref, b2_ref,
                     wp_ref, bp_ref, o_ref, ln_scr, acc_scr):
    """out = x + (GELU(ln @ W1 + b1) * (ln @ W2 + b2)) @ Wp + bp, Hf-tiled."""
    j = pl.program_id(1)

    @pl.when(j == 0)
    def _init():
        x = x_ref[...].astype(jnp.float32)
        mu = jnp.mean(x, axis=-1, keepdims=True)
        var = jnp.mean(jnp.square(x - mu), axis=-1, keepdims=True)
        ln = (x - mu) * jax.lax.rsqrt(var + _LN_EPS)
        ln_scr[...] = ln * g_ref[...] + b_ref[...]
        acc_scr[...] = x + bp_ref[...]          # residual + projection bias

    h = ln_scr[...]
    a = jnp.dot(h, w1_ref[...], preferred_element_type=jnp.float32) + b1_ref[...]
    g = jnp.dot(h, w2_ref[...], preferred_element_type=jnp.float32) + b2_ref[...]
    c = 0.7978845608028654  # sqrt(2/pi)
    gelu_a = 0.5 * a * (1.0 + jnp.tanh(c * (a + 0.044715 * a * a * a)))
    acc_scr[...] += jnp.dot(gelu_a * g, wp_ref[...],
                            preferred_element_type=jnp.float32)

    @pl.when(j == pl.num_programs(1) - 1)
    def _finalize():
        o_ref[...] = acc_scr[...].astype(o_ref.dtype)


def ln_geglu(x2d, gamma, beta, w1, b1, w2, b2, wp, bp):
    """Fused LN + GeGLU FFN + residual; rows parallel, Hf is a reduction axis."""
    N, D = x2d.shape
    Hf = w1.shape[1]
    tm = _row_tile(N)
    th = _col_tile(Hf)
    grid = (N // tm, Hf // th)
    return pl.pallas_call(
        _ln_geglu_kernel,
        out_shape=jax.ShapeDtypeStruct((N, D), x2d.dtype),
        grid=grid,
        in_specs=[pl.BlockSpec((tm, D), lambda i, j: (i, 0)),
                  pl.BlockSpec((1, D), lambda i, j: (0, 0)),
                  pl.BlockSpec((1, D), lambda i, j: (0, 0)),
                  pl.BlockSpec((D, th), lambda i, j: (0, j)),
                  pl.BlockSpec((1, th), lambda i, j: (0, j)),
                  pl.BlockSpec((D, th), lambda i, j: (0, j)),
                  pl.BlockSpec((1, th), lambda i, j: (0, j)),
                  pl.BlockSpec((th, D), lambda i, j: (j, 0)),
                  pl.BlockSpec((1, D), lambda i, j: (0, 0))],
        out_specs=pl.BlockSpec((tm, D), lambda i, j: (i, 0)),
        scratch_shapes=[pltpu.VMEM((tm, D), jnp.float32),   # LayerNorm result
                        pltpu.VMEM((tm, D), jnp.float32)],  # f32 accumulator
        compiler_params=pltpu.CompilerParams(
            dimension_semantics=("parallel", "arbitrary"),
            vmem_limit_bytes=_VMEM_LIMIT),
    )(x2d, gamma.reshape(1, D), beta.reshape(1, D),
      w1, b1.reshape(1, Hf), w2, b2.reshape(1, Hf), wp, bp.reshape(1, D))


# ------------------------------ model (glue) -------------------------------

def init_params(key, cfg):
    D = cfg['emb_dim']; V = cfg['vocab_size']; L = cfg['n_layers']
    C = cfg['context_length']; Hf = 4 * D
    keys = jax.random.split(key, 3 + L * 5)

    def w(k, shape):
        return jax.random.normal(k, shape, jnp.float32) * 0.02

    params = {
        'tok_emb': w(keys[0], (V, D)),
        'pos_emb': w(keys[1], (C, D)),
        'out_head': w(keys[2], (D, V)),        # bias=False, no weight tying
        'final_norm': {'g': jnp.ones((D,), jnp.float32),
                       'b': jnp.zeros((D,), jnp.float32)},
        'blocks': [],
    }
    ki = 3
    for _ in range(L):
        blk = {
            'ln1': {'g': jnp.ones((D,), jnp.float32), 'b': jnp.zeros((D,), jnp.float32)},
            'ln2': {'g': jnp.ones((D,), jnp.float32), 'b': jnp.zeros((D,), jnp.float32)},
            'w_qkv': w(keys[ki + 0], (D, 3 * D)),            # fused [Wq|Wk|Wv]
            'wo': w(keys[ki + 1], (D, D)), 'bo': jnp.zeros((D,), jnp.float32),
            'w1': w(keys[ki + 2], (D, Hf)), 'b1': jnp.zeros((Hf,), jnp.float32),
            'w2': w(keys[ki + 3], (D, Hf)), 'b2': jnp.zeros((Hf,), jnp.float32),
            'wp': w(keys[ki + 4], (Hf, D)), 'bp': jnp.zeros((D,), jnp.float32),
        }
        ki += 5
        params['blocks'].append(blk)
    return params


def gpt_geglu_forward(params, in_idx, attn_mask, cfg):
    B, S = in_idx.shape
    D = cfg['emb_dim']; H = cfg['n_heads']
    N = B * S

    # TODO(synk): embedding gathers and (inference-identity) dropout stay in XLA glue.
    x = params['tok_emb'][in_idx]                                  # (B, S, D)
    if not cfg.get('no_pos_emb', False):
        x = x + params['pos_emb'][:S]

    mask3 = attn_mask.astype(jnp.float32).reshape(B, 1, S)         # 1=attend, 0=pad
    x2d = x.reshape(N, D)

    for blk in params['blocks']:
        # --- attention sub-block: LN1 + fused QKV matmul, then attn+proj+residual
        qkv = ln_matmul(x2d, blk['ln1']['g'], blk['ln1']['b'], blk['w_qkv'])   # (N, 3D)
        x3 = attention_block(qkv.reshape(B, S, 3 * D), mask3,
                             x2d.reshape(B, S, D), blk['wo'], blk['bo'],
                             n_heads=H)                                        # (B, S, D)
        x2d = x3.reshape(N, D)
        # --- GeGLU feed-forward sub-block: LN2 + FFN + residual (one kernel)
        x2d = ln_geglu(x2d, blk['ln2']['g'], blk['ln2']['b'],
                       blk['w1'], blk['b1'], blk['w2'], blk['b2'],
                       blk['wp'], blk['bp'])

    # --- final LayerNorm fused with bias-free out_head (vocab-tiled) ---
    logits = ln_matmul(x2d, params['final_norm']['g'], params['final_norm']['b'],
                       params['out_head'])
    return logits.reshape(B, S, -1)


# --------------------------------- main -------------------------------------

if __name__ == "__main__":
    cfg = {
        'vocab_size': 256,
        'context_length': 16,
        'emb_dim': 32,
        'n_heads': 4,
        'n_layers': 2,
        'drop_rate': 0.0,
        'qkv_bias': False,
        'no_pos_emb': False,
        'weight_tying': False,
    }
    key = jax.random.PRNGKey(0)
    pkey, ikey = jax.random.split(key)
    params = init_params(pkey, cfg)

    B, S = 2, 8
    in_idx = jax.random.randint(ikey, (B, S), 0, cfg['vocab_size'], dtype=jnp.int32)
    attn_mask = jnp.ones((B, S), jnp.float32)      # 1 = attend, 0 = padding

    fwd = jax.jit(functools.partial(gpt_geglu_forward, cfg=cfg))
    logits = fwd(params, in_idx, attn_mask)
    jax.block_until_ready(logits)
    assert logits.shape == (B, S, cfg['vocab_size'])
    assert bool(jnp.all(jnp.isfinite(logits)))
    print("KERNEL_OK")
</pallas_src>

<mosaic_0001>
module attributes {stable_mosaic.version = 11 : i64} {
  func.func @_ln_matmul_kernel(%arg0: i32, %arg1: i32, %arg2: memref<16x32xf32, #tpu.memory_space<vmem>>, %arg3: memref<1x32xf32, #tpu.memory_space<vmem>>, %arg4: memref<1x32xf32, #tpu.memory_space<vmem>>, %arg5: memref<32x96xf32, #tpu.memory_space<vmem>>, %arg6: memref<16x96xf32, #tpu.memory_space<vmem>>, %arg7: memref<16x32xf32, #tpu.memory_space<vmem>>) attributes {dimension_semantics = [#tpu.dimension_semantics<parallel>, #tpu.dimension_semantics<arbitrary>], iteration_bounds = array<i64: 1, 1>, scalar_prefetch = 0 : i64, scratch_operands = 1 : i64, tpu.core_type = #tpu.core_type<tc>, window_params = [{transform_indices = @transform_0, window_bounds = array<i64: 16, 32>}, {pipeline_mode = #tpu.pipeline_mode<synchronous>, transform_indices = @transform_1, window_bounds = array<i64: 1, 32>}, {pipeline_mode = #tpu.pipeline_mode<synchronous>, transform_indices = @transform_2, window_bounds = array<i64: 1, 32>}, {transform_indices = @transform_3, window_bounds = array<i64: 32, 96>}, {transform_indices = @transform_4, window_bounds = array<i64: 16, 96>}]} {
    %c0_i32 = arith.constant 0 : i32
    %0 = arith.cmpi eq, %arg1, %c0_i32 : i32
    %1 = arith.extui %0 : i1 to i32
    %c0_i32_0 = arith.constant 0 : i32
    %2 = arith.cmpi ne, %1, %c0_i32_0 : i32
    scf.if %2 {
      %c0_6 = arith.constant 0 : index
      %c0_7 = arith.constant 0 : index
      %7 = vector.load %arg2[%c0_6, %c0_7] : memref<16x32xf32, #tpu.memory_space<vmem>>, vector<16x32xf32>
      %cst_8 = arith.constant dense<0.000000e+00> : vector<16xf32>
      %8 = vector.multi_reduction <add>, %7, %cst_8 [1] : vector<16x32xf32> to vector<16xf32>
      %9 = vector.shape_cast %8 : vector<16xf32> to vector<16x1xf32>
      %cst_9 = arith.constant 3.200000e+01 : f32
      %10 = vector.broadcast %cst_9 : f32 to vector<16x1xf32>
      %11 = arith.divf %9, %10 : vector<16x1xf32>
      %12 = vector.broadcast %11 : vector<16x1xf32> to vector<16x32xf32>
      %13 = arith.subf %7, %12 : vector<16x32xf32>
      %14 = arith.mulf %13, %13 : vector<16x32xf32>
      %cst_10 = arith.constant dense<0.000000e+00> : vector<16xf32>
      %15 = vector.multi_reduction <add>, %14, %cst_10 [1] : vector<16x32xf32> to vector<16xf32>
      %16 = vector.shape_cast %15 : vector<16xf32> to vector<16x1xf32>
      %cst_11 = arith.constant 3.200000e+01 : f32
      %17 = vector.broadcast %cst_11 : f32 to vector<16x1xf32>
      %18 = arith.divf %16, %17 : vector<16x1xf32>
      %19 = vector.broadcast %11 : vector<16x1xf32> to vector<16x32xf32>
      %20 = arith.subf %7, %19 : vector<16x32xf32>
      %cst_12 = arith.constant 9.99999974E-6 : f32
      %21 = vector.broadcast %cst_12 : f32 to vector<16x1xf32>
      %22 = arith.addf %18, %21 : vector<16x1xf32>
      %23 = math.rsqrt %22 : vector<16x1xf32>
      %24 = vector.broadcast %23 : vector<16x1xf32> to vector<16x32xf32>
      %25 = arith.mulf %20, %24 : vector<16x32xf32>
      %c0_13 = arith.constant 0 : index
      %c0_14 = arith.constant 0 : index
      %26 = vector.load %arg3[%c0_13, %c0_14] : memref<1x32xf32, #tpu.memory_space<vmem>>, vector<1x32xf32>
      %27 = vector.broadcast %26 : vector<1x32xf32> to vector<16x32xf32>
      %28 = arith.mulf %25, %27 : vector<16x32xf32>
      %c0_15 = arith.constant 0 : index
      %c0_16 = arith.constant 0 : index
      %29 = vector.load %arg4[%c0_15, %c0_16] : memref<1x32xf32, #tpu.memory_space<vmem>>, vector<1x32xf32>
      %30 = vector.broadcast %29 : vector<1x32xf32> to vector<16x32xf32>
      %31 = arith.addf %28, %30 : vector<16x32xf32>
      %c0_17 = arith.constant 0 : index
      %c0_18 = arith.constant 0 : index
      %32 = vector.load %arg7[%c0_17, %c0_18] : memref<16x32xf32, #tpu.memory_space<vmem>>, vector<16x32xf32>
      tpu.vector_store %arg7[%c0_17, %c0_18], %31 {strides = array<i32>} : memref<16x32xf32, #tpu.memory_space<vmem>>, vector<16x32xf32>,
    } else {
    }
    %c0 = arith.constant 0 : index
    %c0_1 = arith.constant 0 : index
    %3 = vector.load %arg7[%c0, %c0_1] : memref<16x32xf32, #tpu.memory_space<vmem>>, vector<16x32xf32>
    %c0_2 = arith.constant 0 : index
    %c0_3 = arith.constant 0 : index
    %4 = vector.load %arg5[%c0_2, %c0_3] : memref<32x96xf32, #tpu.memory_space<vmem>>, vector<32x96xf32>
    %cst = arith.constant dense<0.000000e+00> : vector<16x96xf32>
    %5 = tpu.matmul %3, %4, %cst {dimension_numbers = #tpu.dot_dimension_numbers<[1], [0], [0], [1], [0, 0, 1, 1], [], []>} : vector<16x32xf32>, vector<32x96xf32>, vector<16x96xf32> -> vector<16x96xf32>
    %c0_4 = arith.constant 0 : index
    %c0_5 = arith.constant 0 : index
    %6 = vector.load %arg6[%c0_4, %c0_5] : memref<16x96xf32, #tpu.memory_space<vmem>>, vector<16x96xf32>
    tpu.vector_store %arg6[%c0_4, %c0_5], %5 {strides = array<i32>} : memref<16x96xf32, #tpu.memory_space<vmem>>, vector<16x96xf32>,
    return
  }
  func.func @transform_0(%arg0: i32, %arg1: i32) -> (i32, i32) {
    %c0_i32 = arith.constant 0 : i32
    %c0_i32_0 = arith.constant 0 : i32
    return %arg0, %c0_i32 : i32, i32
  }
  func.func @transform_1(%arg0: i32, %arg1: i32) -> (i32, i32) {
    %c0_i32 = arith.constant 0 : i32
    %c0_i32_0 = arith.constant 0 : i32
    %c0_i32_1 = arith.constant 0 : i32
    return %c0_i32, %c0_i32_0 : i32, i32
  }
  func.func @transform_2(%arg0: i32, %arg1: i32) -> (i32, i32) {
    %c0_i32 = arith.constant 0 : i32
    %c0_i32_0 = arith.constant 0 : i32
    %c0_i32_1 = arith.constant 0 : i32
    return %c0_i32, %c0_i32_0 : i32, i32
  }
  func.func @transform_3(%arg0: i32, %arg1: i32) -> (i32, i32) {
    %c0_i32 = arith.constant 0 : i32
    %c0_i32_0 = arith.constant 0 : i32
    return %c0_i32, %arg1 : i32, i32
  }
  func.func @transform_4(%arg0: i32, %arg1: i32) -> (i32, i32) {
    %c0_i32 = arith.constant 0 : i32
    return %arg0, %arg1 : i32, i32
  }
}

module attributes {stable_mosaic.version = 11 : i64} {
  func.func @_attn_proj_kernel(%arg0: i32, %arg1: memref<1x8x96xf32, #tpu.memory_space<vmem>>, %arg2: memref<1x1x8xf32, #tpu.memory_space<vmem>>, %arg3: memref<1x8x32xf32, #tpu.memory_space<vmem>>, %arg4: memref<32x32xf32, #tpu.memory_space<vmem>>, %arg5: memref<1x32xf32, #tpu.memory_space<vmem>>, %arg6: memref<1x8x32xf32, #tpu.memory_space<vmem>>) attributes {dimension_semantics = [#tpu.dimension_semantics<parallel>], iteration_bounds = array<i64: 2>, scalar_prefetch = 0 : i64, scratch_operands = 0 : i64, tpu.core_type = #tpu.core_type<tc>, window_params = [{transform_indices = @transform_0, window_bounds = array<i64: 1, 8, 96>}, {transform_indices = @transform_1, window_bounds = array<i64: 1, 1, 8>}, {transform_indices = @transform_2, window_bounds = array<i64: 1, 8, 32>}, {pipeline_mode = #tpu.pipeline_mode<synchronous>, transform_indices = @transform_3, window_bounds = array<i64: 32, 32>}, {pipeline_mode = #tpu.pipeline_mode<synchronous>, transform_indices = @transform_4, window_bounds = array<i64: 1, 32>}, {transform_indices = @transform_5, window_bounds = array<i64: 1, 8, 32>}]} {
    %c0 = arith.constant 0 : index
    %c0_0 = arith.constant 0 : index
    %c0_1 = arith.constant 0 : index
    %0 = vector.load %arg1[%c0, %c0_0, %c0_1] : memref<1x8x96xf32, #tpu.memory_space<vmem>>, vector<1x8x96xf32>
    %1 = vector.shape_cast %0 : vector<1x8x96xf32> to vector<8x96xf32>
    %cst = arith.constant 8.000000e+00 : f32
    %2 = math.sqrt %cst : f32
    %cst_2 = arith.constant 1.000000e+00 : f32
    %3 = arith.divf %cst_2, %2 : f32
    %4 = vector.extract_strided_slice %1 {offsets = [0, 0], sizes = [8, 32], strides = [1, 1]} : vector<8x96xf32> to vector<8x32xf32>
    %5 = vector.broadcast %3 : f32 to vector<8x32xf32>
    %6 = arith.mulf %4, %5 : vector<8x32xf32>
    %7 = vector.extract_strided_slice %1 {offsets = [0, 32], sizes = [8, 32], strides = [1, 1]} : vector<8x96xf32> to vector<8x32xf32>
    %8 = vector.extract_strided_slice %1 {offsets = [0, 64], sizes = [8, 32], strides = [1, 1]} : vector<8x96xf32> to vector<8x32xf32>
    %c0_3 = arith.constant 0 : index
    %c0_4 = arith.constant 0 : index
    %c0_5 = arith.constant 0 : index
    %9 = vector.load %arg2[%c0_3, %c0_4, %c0_5] : memref<1x1x8xf32, #tpu.memory_space<vmem>>, vector<1x1x8xf32>
    %10 = vector.shape_cast %9 : vector<1x1x8xf32> to vector<1x8xf32>
    %cst_6 = arith.constant 5.000000e-01 : f32
    %11 = vector.broadcast %cst_6 : f32 to vector<1x8xf32>
    %12 = arith.cmpf ogt, %10, %11 : vector<1x8xf32>
    %13 = tpu.iota {dimensions = array<i32: 0>} : vector<8x8xi32>
    %14 = tpu.iota {dimensions = array<i32: 1>} : vector<8x8xi32>
    %15 = arith.cmpi sle, %14, %13 : vector<8x8xi32>
    %16 = vector.broadcast %12 : vector<1x8xi1> to vector<8x8xi1>
    %17 = arith.andi %15, %16 : vector<8x8xi1>
    %cst_7 = arith.constant 0.000000e+00 : f32
    %cst_8 = arith.constant -1.000000e+30 : f32
    %18 = vector.broadcast %cst_7 : f32 to vector<8x8xf32>
    %19 = vector.broadcast %cst_8 : f32 to vector<8x8xf32>
    %20 = arith.select %17, %18, %19 : vector<8x8xi1>, vector<8x8xf32>
    %21 = vector.extract_strided_slice %6 {offsets = [0, 0], sizes = [8, 8], strides = [1, 1]} : vector<8x32xf32> to vector<8x8xf32>
    %22 = vector.extract_strided_slice %7 {offsets = [0, 0], sizes = [8, 8], strides = [1, 1]} : vector<8x32xf32> to vector<8x8xf32>
    %23 = vector.extract_strided_slice %8 {offsets = [0, 0], sizes = [8, 8], strides = [1, 1]} : vector<8x32xf32> to vector<8x8xf32>
    %cst_9 = arith.constant dense<0.000000e+00> : vector<8x8xf32>
    %24 = tpu.matmul %21, %22, %cst_9 {dimension_numbers = #tpu.dot_dimension_numbers<[1], [1], [0], [0], [0, 0, 1, 0], [], []>} : vector<8x8xf32>, vector<8x8xf32>, vector<8x8xf32> -> vector<8x8xf32>
    %25 = arith.addf %24, %20 : vector<8x8xf32>
    %cst_10 = arith.constant dense<0xFF800000> : vector<8xf32>
    %26 = vector.multi_reduction <maximumf>, %25, %cst_10 [1] : vector<8x8xf32> to vector<8xf32>
    %27 = vector.shape_cast %26 : vector<8xf32> to vector<8x1xf32>
    %28 = vector.broadcast %27 : vector<8x1xf32> to vector<8x8xf32>
    %29 = arith.subf %25, %28 : vector<8x8xf32>
    %30 = math.exp %29 : vector<8x8xf32>
    %cst_11 = arith.constant dense<0.000000e+00> : vector<8xf32>
    %31 = vector.multi_reduction <add>, %30, %cst_11 [1] : vector<8x8xf32> to vector<8xf32>
    %32 = vector.shape_cast %31 : vector<8xf32> to vector<8x1xf32>
    %33 = tpu.reciprocal %32 {approx = true} : vector<8x1xf32> -> vector<8x1xf32>
    %34 = vector.broadcast %33 : vector<8x1xf32> to vector<8x8xf32>
    %35 = arith.mulf %30, %34 : vector<8x8xf32>
    %cst_12 = arith.constant dense<0.000000e+00> : vector<8x8xf32>
    %36 = tpu.matmul %35, %23, %cst_12 {dimension_numbers = #tpu.dot_dimension_numbers<[1], [0], [0], [1], [0, 0, 1, 1], [], []>} : vector<8x8xf32>, vector<8x8xf32>, vector<8x8xf32> -> vector<8x8xf32>
    %37 = vector.extract_strided_slice %6 {offsets = [0, 8], sizes = [8, 8], strides = [1, 1]} : vector<8x32xf32> to vector<8x8xf32>
    %38 = vector.extract_strided_slice %7 {offsets = [0, 8], sizes = [8, 8], strides = [1, 1]} : vector<8x32xf32> to vector<8x8xf32>
    %39 = vector.extract_strided_slice %8 {offsets = [0, 8], sizes = [8, 8], strides = [1, 1]} : vector<8x32xf32> to vector<8x8xf32>
    %cst_13 = arith.constant dense<0.000000e+00> : vector<8x8xf32>
    %40 = tpu.matmul %37, %38, %cst_13 {dimension_numbers = #tpu.dot_dimension_numbers<[1], [1], [0], [0], [0, 0, 1, 0], [], []>} : vector<8x8xf32>, vector<8x8xf32>, vector<8x8xf32> -> vector<8x8xf32>
    %41 = arith.addf %40, %20 : vector<8x8xf32>
    %cst_14 = arith.constant dense<0xFF800000> : vector<8xf32>
    %42 = vector.multi_reduction <maximumf>, %41, %cst_14 [1] : vector<8x8xf32> to vector<8xf32>
    %43 = vector.shape_cast %42 : vector<8xf32> to vector<8x1xf32>
    %44 = vector.broadcast %43 : vector<8x1xf32> to vector<8x8xf32>
    %45 = arith.subf %41, %44 : vector<8x8xf32>
    %46 = math.exp %45 : vector<8x8xf32>
    %cst_15 = arith.constant dense<0.000000e+00> : vector<8xf32>
    %47 = vector.multi_reduction <add>, %46, %cst_15 [1] : vector<8x8xf32> to vector<8xf32>
    %48 = vector.shape_cast %47 : vector<8xf32> to vector<8x1xf32>
    %49 = tpu.reciprocal %48 {approx = true} : vector<8x1xf32> -> vector<8x1xf32>
    %50 = vector.broadcast %49 : vector<8x1xf32> to vector<8x8xf32>
    %51 = arith.mulf %46, %50 : vector<8x8xf32>
    %cst_16 = arith.constant dense<0.000000e+00> : vector<8x8xf32>
    %52 = tpu.matmul %51, %39, %cst_16 {dimension_numbers = #tpu.dot_dimension_numbers<[1], [0], [0], [1], [0, 0, 1, 1], [], []>} : vector<8x8xf32>, vector<8x8xf32>, vector<8x8xf32> -> vector<8x8xf32>
    %53 = vector.extract_strided_slice %6 {offsets = [0, 16], sizes = [8, 8], strides = [1, 1]} : vector<8x32xf32> to vector<8x8xf32>
    %54 = vector.extract_strided_slice %7 {offsets = [0, 16], sizes = [8, 8], strides = [1, 1]} : vector<8x32xf32> to vector<8x8xf32>
    %55 = vector.extract_strided_slice %8 {offsets = [0, 16], sizes = [8, 8], strides = [1, 1]} : vector<8x32xf32> to vector<8x8xf32>
    %cst_17 = arith.constant dense<0.000000e+00> : vector<8x8xf32>
    %56 = tpu.matmul %53, %54, %cst_17 {dimension_numbers = #tpu.dot_dimension_numbers<[1], [1], [0], [0], [0, 0, 1, 0], [], []>} : vector<8x8xf32>, vector<8x8xf32>, vector<8x8xf32> -> vector<8x8xf32>
    %57 = arith.addf %56, %20 : vector<8x8xf32>
    %cst_18 = arith.constant dense<0xFF800000> : vector<8xf32>
    %58 = vector.multi_reduction <maximumf>, %57, %cst_18 [1] : vector<8x8xf32> to vector<8xf32>
    %59 = vector.shape_cast %58 : vector<8xf32> to vector<8x1xf32>
    %60 = vector.broadcast %59 : vector<8x1xf32> to vector<8x8xf32>
    %61 = arith.subf %57, %60 : vector<8x8xf32>
    %62 = math.exp %61 : vector<8x8xf32>
    %cst_19 = arith.constant dense<0.000000e+00> : vector<8xf32>
    %63 = vector.multi_reduction <add>, %62, %cst_19 [1] : vector<8x8xf32> to vector<8xf32>
    %64 = vector.shape_cast %63 : vector<8xf32> to vector<8x1xf32>
    %65 = tpu.reciprocal %64 {approx = true} : vector<8x1xf32> -> vector<8x1xf32>
    %66 = vector.broadcast %65 : vector<8x1xf32> to vector<8x8xf32>
    %67 = arith.mulf %62, %66 : vector<8x8xf32>
    %cst_20 = arith.constant dense<0.000000e+00> : vector<8x8xf32>
    %68 = tpu.matmul %67, %55, %cst_20 {dimension_numbers = #tpu.dot_dimension_numbers<[1], [0], [0], [1], [0, 0, 1, 1], [], []>} : vector<8x8xf32>, vector<8x8xf32>, vector<8x8xf32> -> vector<8x8xf32>
    %69 = vector.extract_strided_slice %6 {offsets = [0, 24], sizes = [8, 8], strides = [1, 1]} : vector<8x32xf32> to vector<8x8xf32>
    %70 = vector.extract_strided_slice %7 {offsets = [0, 24], sizes = [8, 8], strides = [1, 1]} : vector<8x32xf32> to vector<8x8xf32>
    %71 = vector.extract_strided_slice %8 {offsets = [0, 24], sizes = [8, 8], strides = [1, 1]} : vector<8x32xf32> to vector<8x8xf32>
    %cst_21 = arith.constant dense<0.000000e+00> : vector<8x8xf32>
    %72 = tpu.matmul %69, %70, %cst_21 {dimension_numbers = #tpu.dot_dimension_numbers<[1], [1], [0], [0], [0, 0, 1, 0], [], []>} : vector<8x8xf32>, vector<8x8xf32>, vector<8x8xf32> -> vector<8x8xf32>
    %73 = arith.addf %72, %20 : vector<8x8xf32>
    %cst_22 = arith.constant dense<0xFF800000> : vector<8xf32>
    %74 = vector.multi_reduction <maximumf>, %73, %cst_22 [1] : vector<8x8xf32> to vector<8xf32>
    %75 = vector.shape_cast %74 : vector<8xf32> to vector<8x1xf32>
    %76 = vector.broadcast %75 : vector<8x1xf32> to vector<8x8xf32>
    %77 = arith.subf %73, %76 : vector<8x8xf32>
    %78 = math.exp %77 : vector<8x8xf32>
    %cst_23 = arith.constant dense<0.000000e+00> : vector<8xf32>
    %79 = vector.multi_reduction <add>, %78, %cst_23 [1] : vector<8x8xf32> to vector<8xf32>
    %80 = vector.shape_cast %79 : vector<8xf32> to vector<8x1xf32>
    %81 = tpu.reciprocal %80 {approx = true} : vector<8x1xf32> -> vector<8x1xf32>
    %82 = vector.broadcast %81 : vector<8x1xf32> to vector<8x8xf32>
    %83 = arith.mulf %78, %82 : vector<8x8xf32>
    %cst_24 = arith.constant dense<0.000000e+00> : vector<8x8xf32>
    %84 = tpu.matmul %83, %71, %cst_24 {dimension_numbers = #tpu.dot_dimension_numbers<[1], [0], [0], [1], [0, 0, 1, 1], [], []>} : vector<8x8xf32>, vector<8x8xf32>, vector<8x8xf32> -> vector<8x8xf32>
    %85 = tpu.concatenate %36, %52, %68, %84 in 1 : vector<8x8xf32>, vector<8x8xf32>, vector<8x8xf32>, vector<8x8xf32> -> vector<8x32xf32>
    %c0_25 = arith.constant 0 : index
    %c0_26 = arith.constant 0 : index
    %86 = vector.load %arg4[%c0_25, %c0_26] : memref<32x32xf32, #tpu.memory_space<vmem>>, vector<32x32xf32>
    %cst_27 = arith.constant dense<0.000000e+00> : vector<8x32xf32>
    %87 = tpu.matmul %85, %86, %cst_27 {dimension_numbers = #tpu.dot_dimension_numbers<[1], [0], [0], [1], [0, 0, 1, 1], [], []>} : vector<8x32xf32>, vector<32x32xf32>, vector<8x32xf32> -> vector<8x32xf32>
    %c0_28 = arith.constant 0 : index
    %c0_29 = arith.constant 0 : index
    %88 = vector.load %arg5[%c0_28, %c0_29] : memref<1x32xf32, #tpu.memory_space<vmem>>, vector<1x32xf32>
    %89 = vector.broadcast %88 : vector<1x32xf32> to vector<8x32xf32>
    %90 = arith.addf %87, %89 : vector<8x32xf32>
    %c0_30 = arith.constant 0 : index
    %c0_31 = arith.constant 0 : index
    %c0_32 = arith.constant 0 : index
    %91 = vector.load %arg3[%c0_30, %c0_31, %c0_32] : memref<1x8x32xf32, #tpu.memory_space<vmem>>, vector<1x8x32xf32>
    %92 = vector.shape_cast %91 : vector<1x8x32xf32> to vector<8x32xf32>
    %93 = arith.addf %92, %90 : vector<8x32xf32>
    %c0_33 = arith.constant 0 : index
    %c0_34 = arith.constant 0 : index
    %c0_35 = arith.constant 0 : index
    %94 = vector.load %arg6[%c0_33, %c0_34, %c0_35] : memref<1x8x32xf32, #tpu.memory_space<vmem>>, vector<1x8x32xf32>
    %95 = vector.shape_cast %94 : vector<1x8x32xf32> to vector<8x32xf32>
    %96 = vector.shape_cast %93 : vector<8x32xf32> to vector<1x8x32xf32>
    tpu.vector_store %arg6[%c0_33, %c0_34, %c0_35], %96 {strides = array<i32>} : memref<1x8x32xf32, #tpu.memory_space<vmem>>, vector<1x8x32xf32>,
    return
  }
  func.func @transform_0(%arg0: i32) -> (i32, i32, i32) {
    %c0_i32 = arith.constant 0 : i32
    %c0_i32_0 = arith.constant 0 : i32
    %c0_i32_1 = arith.constant 0 : i32
    return %arg0, %c0_i32, %c0_i32_0 : i32, i32, i32
  }
  func.func @transform_1(%arg0: i32) -> (i32, i32, i32) {
    %c0_i32 = arith.constant 0 : i32
    %c0_i32_0 = arith.constant 0 : i32
    %c0_i32_1 = arith.constant 0 : i32
    return %arg0, %c0_i32, %c0_i32_0 : i32, i32, i32
  }
  func.func @transform_2(%arg0: i32) -> (i32, i32, i32) {
    %c0_i32 = arith.constant 0 : i32
    %c0_i32_0 = arith.constant 0 : i32
    %c0_i32_1 = arith.constant 0 : i32
    return %arg0, %c0_i32, %c0_i32_0 : i32, i32, i32
  }
  func.func @transform_3(%arg0: i32) -> (i32, i32) {
    %c0_i32 = arith.constant 0 : i32
    %c0_i32_0 = arith.constant 0 : i32
    %c0_i32_1 = arith.constant 0 : i32
    return %c0_i32, %c0_i32_0 : i32, i32
  }
  func.func @transform_4(%arg0: i32) -> (i32, i32) {
    %c0_i32 = arith.constant 0 : i32
    %c0_i32_0 = arith.constant 0 : i32
    %c0_i32_1 = arith.constant 0 : i32
    return %c0_i32, %c0_i32_0 : i32, i32
  }
  func.func @transform_5(%arg0: i32) -> (i32, i32, i32) {
    %c0_i32 = arith.constant 0 : i32
    %c0_i32_0 = arith.constant 0 : i32
    %c0_i32_1 = arith.constant 0 : i32
    return %arg0, %c0_i32, %c0_i32_0 : i32, i32, i32
  }
}

module attributes {stable_mosaic.version = 11 : i64} {
  func.func @_ln_geglu_kernel(%arg0: i32, %arg1: i32, %arg2: memref<16x32xf32, #tpu.memory_space<vmem>>, %arg3: memref<1x32xf32, #tpu.memory_space<vmem>>, %arg4: memref<1x32xf32, #tpu.memory_space<vmem>>, %arg5: memref<32x128xf32, #tpu.memory_space<vmem>>, %arg6: memref<1x128xf32, #tpu.memory_space<vmem>>, %arg7: memref<32x128xf32, #tpu.memory_space<vmem>>, %arg8: memref<1x128xf32, #tpu.memory_space<vmem>>, %arg9: memref<128x32xf32, #tpu.memory_space<vmem>>, %arg10: memref<1x32xf32, #tpu.memory_space<vmem>>, %arg11: memref<16x32xf32, #tpu.memory_space<vmem>>, %arg12: memref<16x32xf32, #tpu.memory_space<vmem>>, %arg13: memref<16x32xf32, #tpu.memory_space<vmem>>) attributes {dimension_semantics = [#tpu.dimension_semantics<parallel>, #tpu.dimension_semantics<arbitrary>], iteration_bounds = array<i64: 1, 1>, scalar_prefetch = 0 : i64, scratch_operands = 2 : i64, tpu.core_type = #tpu.core_type<tc>, window_params = [{transform_indices = @transform_0, window_bounds = array<i64: 16, 32>}, {pipeline_mode = #tpu.pipeline_mode<synchronous>, transform_indices = @transform_1, window_bounds = array<i64: 1, 32>}, {pipeline_mode = #tpu.pipeline_mode<synchronous>, transform_indices = @transform_2, window_bounds = array<i64: 1, 32>}, {transform_indices = @transform_3, window_bounds = array<i64: 32, 128>}, {transform_indices = @transform_4, window_bounds = array<i64: 1, 128>}, {transform_indices = @transform_5, window_bounds = array<i64: 32, 128>}, {transform_indices = @transform_6, window_bounds = array<i64: 1, 128>}, {transform_indices = @transform_7, window_bounds = array<i64: 128, 32>}, {pipeline_mode = #tpu.pipeline_mode<synchronous>, transform_indices = @transform_8, window_bounds = array<i64: 1, 32>}, {transform_indices = @transform_9, window_bounds = array<i64: 16, 32>}]} {
    %c0_i32 = arith.constant 0 : i32
    %0 = arith.cmpi eq, %arg1, %c0_i32 : i32
    %1 = arith.extui %0 : i1 to i32
    %c0_i32_0 = arith.constant 0 : i32
    %2 = arith.cmpi ne, %1, %c0_i32_0 : i32
    scf.if %2 {
      %c0_24 = arith.constant 0 : index
      %c0_25 = arith.constant 0 : index
      %36 = vector.load %arg2[%c0_24, %c0_25] : memref<16x32xf32, #tpu.memory_space<vmem>>, vector<16x32xf32>
      %cst_26 = arith.constant dense<0.000000e+00> : vector<16xf32>
      %37 = vector.multi_reduction <add>, %36, %cst_26 [1] : vector<16x32xf32> to vector<16xf32>
      %38 = vector.shape_cast %37 : vector<16xf32> to vector<16x1xf32>
      %cst_27 = arith.constant 3.200000e+01 : f32
      %39 = vector.broadcast %cst_27 : f32 to vector<16x1xf32>
      %40 = arith.divf %38, %39 : vector<16x1xf32>
      %41 = vector.broadcast %40 : vector<16x1xf32> to vector<16x32xf32>
      %42 = arith.subf %36, %41 : vector<16x32xf32>
      %43 = arith.mulf %42, %42 : vector<16x32xf32>
      %cst_28 = arith.constant dense<0.000000e+00> : vector<16xf32>
      %44 = vector.multi_reduction <add>, %43, %cst_28 [1] : vector<16x32xf32> to vector<16xf32>
      %45 = vector.shape_cast %44 : vector<16xf32> to vector<16x1xf32>
      %cst_29 = arith.constant 3.200000e+01 : f32
      %46 = vector.broadcast %cst_29 : f32 to vector<16x1xf32>
      %47 = arith.divf %45, %46 : vector<16x1xf32>
      %48 = vector.broadcast %40 : vector<16x1xf32> to vector<16x32xf32>
      %49 = arith.subf %36, %48 : vector<16x32xf32>
      %cst_30 = arith.constant 9.99999974E-6 : f32
      %50 = vector.broadcast %cst_30 : f32 to vector<16x1xf32>
      %51 = arith.addf %47, %50 : vector<16x1xf32>
      %52 = math.rsqrt %51 : vector<16x1xf32>
      %53 = vector.broadcast %52 : vector<16x1xf32> to vector<16x32xf32>
      %54 = arith.mulf %49, %53 : vector<16x32xf32>
      %c0_31 = arith.constant 0 : index
      %c0_32 = arith.constant 0 : index
      %55 = vector.load %arg3[%c0_31, %c0_32] : memref<1x32xf32, #tpu.memory_space<vmem>>, vector<1x32xf32>
      %56 = vector.broadcast %55 : vector<1x32xf32> to vector<16x32xf32>
      %57 = arith.mulf %54, %56 : vector<16x32xf32>
      %c0_33 = arith.constant 0 : index
      %c0_34 = arith.constant 0 : index
      %58 = vector.load %arg4[%c0_33, %c0_34] : memref<1x32xf32, #tpu.memory_space<vmem>>, vector<1x32xf32>
      %59 = vector.broadcast %58 : vector<1x32xf32> to vector<16x32xf32>
      %60 = arith.addf %57, %59 : vector<16x32xf32>
      %c0_35 = arith.constant 0 : index
      %c0_36 = arith.constant 0 : index
      %61 = vector.load %arg12[%c0_35, %c0_36] : memref<16x32xf32, #tpu.memory_space<vmem>>, vector<16x32xf32>
      tpu.vector_store %arg12[%c0_35, %c0_36], %60 {strides = array<i32>} : memref<16x32xf32, #tpu.memory_space<vmem>>, vector<16x32xf32>,
      %c0_37 = arith.constant 0 : index
      %c0_38 = arith.constant 0 : index
      %62 = vector.load %arg10[%c0_37, %c0_38] : memref<1x32xf32, #tpu.memory_space<vmem>>, vector<1x32xf32>
      %63 = vector.broadcast %62 : vector<1x32xf32> to vector<16x32xf32>
      %64 = arith.addf %36, %63 : vector<16x32xf32>
      %c0_39 = arith.constant 0 : index
      %c0_40 = arith.constant 0 : index
      %65 = vector.load %arg13[%c0_39, %c0_40] : memref<16x32xf32, #tpu.memory_space<vmem>>, vector<16x32xf32>
      tpu.vector_store %arg13[%c0_39, %c0_40], %64 {strides = array<i32>} : memref<16x32xf32, #tpu.memory_space<vmem>>, vector<16x32xf32>,
    } else {
    }
    %c0 = arith.constant 0 : index
    %c0_1 = arith.constant 0 : index
    %3 = vector.load %arg12[%c0, %c0_1] : memref<16x32xf32, #tpu.memory_space<vmem>>, vector<16x32xf32>
    %c0_2 = arith.constant 0 : index
    %c0_3 = arith.constant 0 : index
    %4 = vector.load %arg5[%c0_2, %c0_3] : memref<32x128xf32, #tpu.memory_space<vmem>>, vector<32x128xf32>
    %cst = arith.constant dense<0.000000e+00> : vector<16x128xf32>
    %5 = tpu.matmul %3, %4, %cst {dimension_numbers = #tpu.dot_dimension_numbers<[1], [0], [0], [1], [0, 0, 1, 1], [], []>} : vector<16x32xf32>, vector<32x128xf32>, vector<16x128xf32> -> vector<16x128xf32>
    %c0_4 = arith.constant 0 : index
    %c0_5 = arith.constant 0 : index
    %6 = vector.load %arg6[%c0_4, %c0_5] : memref<1x128xf32, #tpu.memory_space<vmem>>, vector<1x128xf32>
    %7 = vector.broadcast %6 : vector<1x128xf32> to vector<16x128xf32>
    %8 = arith.addf %5, %7 : vector<16x128xf32>
    %c0_6 = arith.constant 0 : index
    %c0_7 = arith.constant 0 : index
    %9 = vector.load %arg7[%c0_6, %c0_7] : memref<32x128xf32, #tpu.memory_space<vmem>>, vector<32x128xf32>
    %cst_8 = arith.constant dense<0.000000e+00> : vector<16x128xf32>
    %10 = tpu.matmul %3, %9, %cst_8 {dimension_numbers = #tpu.dot_dimension_numbers<[1], [0], [0], [1], [0, 0, 1, 1], [], []>} : vector<16x32xf32>, vector<32x128xf32>, vector<16x128xf32> -> vector<16x128xf32>
    %c0_9 = arith.constant 0 : index
    %c0_10 = arith.constant 0 : index
    %11 = vector.load %arg8[%c0_9, %c0_10] : memref<1x128xf32, #tpu.memory_space<vmem>>, vector<1x128xf32>
    %12 = vector.broadcast %11 : vector<1x128xf32> to vector<16x128xf32>
    %13 = arith.addf %10, %12 : vector<16x128xf32>
    %cst_11 = arith.constant 5.000000e-01 : f32
    %14 = vector.broadcast %cst_11 : f32 to vector<16x128xf32>
    %15 = arith.mulf %14, %8 : vector<16x128xf32>
    %cst_12 = arith.constant 4.471500e-02 : f32
    %16 = vector.broadcast %cst_12 : f32 to vector<16x128xf32>
    %17 = arith.mulf %16, %8 : vector<16x128xf32>
    %18 = arith.mulf %17, %8 : vector<16x128xf32>
    %19 = arith.mulf %18, %8 : vector<16x128xf32>
    %20 = arith.addf %8, %19 : vector<16x128xf32>
    %cst_13 = arith.constant 0.797884583 : f32
    %21 = vector.broadcast %cst_13 : f32 to vector<16x128xf32>
    %22 = arith.mulf %21, %20 : vector<16x128xf32>
    %23 = math.tanh %22 : vector<16x128xf32>
    %cst_14 = arith.constant 1.000000e+00 : f32
    %24 = vector.broadcast %cst_14 : f32 to vector<16x128xf32>
    %25 = arith.addf %24, %23 : vector<16x128xf32>
    %26 = arith.mulf %15, %25 : vector<16x128xf32>
    %c0_15 = arith.constant 0 : index
    %c0_16 = arith.constant 0 : index
    %27 = vector.load %arg13[%c0_15, %c0_16] : memref<16x32xf32, #tpu.memory_space<vmem>>, vector<16x32xf32>
    %28 = arith.mulf %26, %13 : vector<16x128xf32>
    %c0_17 = arith.constant 0 : index
    %c0_18 = arith.constant 0 : index
    %29 = vector.load %arg9[%c0_17, %c0_18] : memref<128x32xf32, #tpu.memory_space<vmem>>, vector<128x32xf32>
    %cst_19 = arith.constant dense<0.000000e+00> : vector<16x32xf32>
    %30 = tpu.matmul %28, %29, %cst_19 {dimension_numbers = #tpu.dot_dimension_numbers<[1], [0], [0], [1], [0, 0, 1, 1], [], []>} : vector<16x128xf32>, vector<128x32xf32>, vector<16x32xf32> -> vector<16x32xf32>
    %31 = arith.addf %27, %30 : vector<16x32xf32>
    %c0_20 = arith.constant 0 : index
    %c0_21 = arith.constant 0 : index
    %32 = vector.load %arg13[%c0_20, %c0_21] : memref<16x32xf32, #tpu.memory_space<vmem>>, vector<16x32xf32>
    tpu.vector_store %arg13[%c0_20, %c0_21], %31 {strides = array<i32>} : memref<16x32xf32, #tpu.memory_space<vmem>>, vector<16x32xf32>,
    %c0_i32_22 = arith.constant 0 : i32
    %33 = arith.cmpi eq, %arg1, %c0_i32_22 : i32
    %34 = arith.extui %33 : i1 to i32
    %c0_i32_23 = arith.constant 0 : i32
    %35 = arith.cmpi ne, %34, %c0_i32_23 : i32
    scf.if %35 {
      %c0_24 = arith.constant 0 : index
      %c0_25 = arith.constant 0 : index
      %36 = vector.load %arg13[%c0_24, %c0_25] : memref<16x32xf32, #tpu.memory_space<vmem>>, vector<16x32xf32>
      %c0_26 = arith.constant 0 : index
      %c0_27 = arith.constant 0 : index
      %37 = vector.load %arg11[%c0_26, %c0_27] : memref<16x32xf32, #tpu.memory_space<vmem>>, vector<16x32xf32>
      tpu.vector_store %arg11[%c0_26, %c0_27], %36 {strides = array<i32>} : memref<16x32xf32, #tpu.memory_space<vmem>>, vector<16x32xf32>,
    } else {
    }
    return
  }
  func.func @transform_0(%arg0: i32, %arg1: i32) -> (i32, i32) {
    %c0_i32 = arith.constant 0 : i32
    %c0_i32_0 = arith.constant 0 : i32
    return %arg0, %c0_i32 : i32, i32
  }
  func.func @transform_1(%arg0: i32, %arg1: i32) -> (i32, i32) {
    %c0_i32 = arith.constant 0 : i32
    %c0_i32_0 = arith.constant 0 : i32
    %c0_i32_1 = arith.constant 0 : i32
    return %c0_i32, %c0_i32_0 : i32, i32
  }
  func.func @transform_2(%arg0: i32, %arg1: i32) -> (i32, i32) {
    %c0_i32 = arith.constant 0 : i32
    %c0_i32_0 = arith.constant 0 : i32
    %c0_i32_1 = arith.constant 0 : i32
    return %c0_i32, %c0_i32_0 : i32, i32
  }
  func.func @transform_3(%arg0: i32, %arg1: i32) -> (i32, i32) {
    %c0_i32 = arith.constant 0 : i32
    %c0_i32_0 = arith.constant 0 : i32
    return %c0_i32, %arg1 : i32, i32
  }
  func.func @transform_4(%arg0: i32, %arg1: i32) -> (i32, i32) {
    %c0_i32 = arith.constant 0 : i32
    %c0_i32_0 = arith.constant 0 : i32
    return %c0_i32, %arg1 : i32, i32
  }
  func.func @transform_5(%arg0: i32, %arg1: i32) -> (i32, i32) {
    %c0_i32 = arith.constant 0 : i32
    %c0_i32_0 = arith.constant 0 : i32
    return %c0_i32, %arg1 : i32, i32
  }
  func.func @transform_6(%arg0: i32, %arg1: i32) -> (i32, i32) {
    %c0_i32 = arith.constant 0 : i32
    %c0_i32_0 = arith.constant 0 : i32
    return %c0_i32, %arg1 : i32, i32
  }
  func.func @transform_7(%arg0: i32, %arg1: i32) -> (i32, i32) {
    %c0_i32 = arith.constant 0 : i32
    %c0_i32_0 = arith.constant 0 : i32
    return %arg1, %c0_i32 : i32, i32
  }
  func.func @transform_8(%arg0: i32, %arg1: i32) -> (i32, i32) {
    %c0_i32 = arith.constant 0 : i32
    %c0_i32_0 = arith.constant 0 : i32
    %c0_i32_1 = arith.constant 0 : i32
    return %c0_i32, %c0_i32_0 : i32, i32
  }
  func.func @transform_9(%arg0: i32, %arg1: i32) -> (i32, i32) {
    %c0_i32 = arith.constant 0 : i32
    %c0_i32_0 = arith.constant 0 : i32
    return %arg0, %c0_i32 : i32, i32
  }
}

module attributes {stable_mosaic.version = 11 : i64} {
  func.func @_ln_matmul_kernel(%arg0: i32, %arg1: i32, %arg2: memref<16x32xf32, #tpu.memory_space<vmem>>, %arg3: memref<1x32xf32, #tpu.memory_space<vmem>>, %arg4: memref<1x32xf32, #tpu.memory_space<vmem>>, %arg5: memref<32x256xf32, #tpu.memory_space<vmem>>, %arg6: memref<16x256xf32, #tpu.memory_space<vmem>>, %arg7: memref<16x32xf32, #tpu.memory_space<vmem>>) attributes {dimension_semantics = [#tpu.dimension_semantics<parallel>, #tpu.dimension_semantics<arbitrary>], iteration_bounds = array<i64: 1, 1>, scalar_prefetch = 0 : i64, scratch_operands = 1 : i64, tpu.core_type = #tpu.core_type<tc>, window_params = [{transform_indices = @transform_0, window_bounds = array<i64: 16, 32>}, {pipeline_mode = #tpu.pipeline_mode<synchronous>, transform_indices = @transform_1, window_bounds = array<i64: 1, 32>}, {pipeline_mode = #tpu.pipeline_mode<synchronous>, transform_indices = @transform_2, window_bounds = array<i64: 1, 32>}, {transform_indices = @transform_3, window_bounds = array<i64: 32, 256>}, {transform_indices = @transform_4, window_bounds = array<i64: 16, 256>}]} {
    %c0_i32 = arith.constant 0 : i32
    %0 = arith.cmpi eq, %arg1, %c0_i32 : i32
    %1 = arith.extui %0 : i1 to i32
    %c0_i32_0 = arith.constant 0 : i32
    %2 = arith.cmpi ne, %1, %c0_i32_0 : i32
    scf.if %2 {
      %c0_6 = arith.constant 0 : index
      %c0_7 = arith.constant 0 : index
      %7 = vector.load %arg2[%c0_6, %c0_7] : memref<16x32xf32, #tpu.memory_space<vmem>>, vector<16x32xf32>
      %cst_8 = arith.constant dense<0.000000e+00> : vector<16xf32>
      %8 = vector.multi_reduction <add>, %7, %cst_8 [1] : vector<16x32xf32> to vector<16xf32>
      %9 = vector.shape_cast %8 : vector<16xf32> to vector<16x1xf32>
      %cst_9 = arith.constant 3.200000e+01 : f32
      %10 = vector.broadcast %cst_9 : f32 to vector<16x1xf32>
      %11 = arith.divf %9, %10 : vector<16x1xf32>
      %12 = vector.broadcast %11 : vector<16x1xf32> to vector<16x32xf32>
      %13 = arith.subf %7, %12 : vector<16x32xf32>
      %14 = arith.mulf %13, %13 : vector<16x32xf32>
      %cst_10 = arith.constant dense<0.000000e+00> : vector<16xf32>
      %15 = vector.multi_reduction <add>, %14, %cst_10 [1] : vector<16x32xf32> to vector<16xf32>
      %16 = vector.shape_cast %15 : vector<16xf32> to vector<16x1xf32>
      %cst_11 = arith.constant 3.200000e+01 : f32
      %17 = vector.broadcast %cst_11 : f32 to vector<16x1xf32>
      %18 = arith.divf %16, %17 : vector<16x1xf32>
      %19 = vector.broadcast %11 : vector<16x1xf32> to vector<16x32xf32>
      %20 = arith.subf %7, %19 : vector<16x32xf32>
      %cst_12 = arith.constant 9.99999974E-6 : f32
      %21 = vector.broadcast %cst_12 : f32 to vector<16x1xf32>
      %22 = arith.addf %18, %21 : vector<16x1xf32>
      %23 = math.rsqrt %22 : vector<16x1xf32>
      %24 = vector.broadcast %23 : vector<16x1xf32> to vector<16x32xf32>
      %25 = arith.mulf %20, %24 : vector<16x32xf32>
      %c0_13 = arith.constant 0 : index
      %c0_14 = arith.constant 0 : index
      %26 = vector.load %arg3[%c0_13, %c0_14] : memref<1x32xf32, #tpu.memory_space<vmem>>, vector<1x32xf32>
      %27 = vector.broadcast %26 : vector<1x32xf32> to vector<16x32xf32>
      %28 = arith.mulf %25, %27 : vector<16x32xf32>
      %c0_15 = arith.constant 0 : index
      %c0_16 = arith.constant 0 : index
      %29 = vector.load %arg4[%c0_15, %c0_16] : memref<1x32xf32, #tpu.memory_space<vmem>>, vector<1x32xf32>
      %30 = vector.broadcast %29 : vector<1x32xf32> to vector<16x32xf32>
      %31 = arith.addf %28, %30 : vector<16x32xf32>
      %c0_17 = arith.constant 0 : index
      %c0_18 = arith.constant 0 : index
      %32 = vector.load %arg7[%c0_17, %c0_18] : memref<16x32xf32, #tpu.memory_space<vmem>>, vector<16x32xf32>
      tpu.vector_store %arg7[%c0_17, %c0_18], %31 {strides = array<i32>} : memref<16x32xf32, #tpu.memory_space<vmem>>, vector<16x32xf32>,
    } else {
    }
    %c0 = arith.constant 0 : index
    %c0_1 = arith.constant 0 : index
    %3 = vector.load %arg7[%c0, %c0_1] : memref<16x32xf32, #tpu.memory_space<vmem>>, vector<16x32xf32>
    %c0_2 = arith.constant 0 : index
    %c0_3 = arith.constant 0 : index
    %4 = vector.load %arg5[%c0_2, %c0_3] : memref<32x256xf32, #tpu.memory_space<vmem>>, vector<32x256xf32>
    %cst = arith.constant dense<0.000000e+00> : vector<16x256xf32>
    %5 = tpu.matmul %3, %4, %cst {dimension_numbers = #tpu.dot_dimension_numbers<[1], [0], [0], [1], [0, 0, 1, 1], [], []>} : vector<16x32xf32>, vector<32x256xf32>, vector<16x256xf32> -> vector<16x256xf32>
    %c0_4 = arith.constant 0 : index
    %c0_5 = arith.constant 0 : index
    %6 = vector.load %arg6[%c0_4, %c0_5] : memref<16x256xf32, #tpu.memory_space<vmem>>, vector<16x256xf32>
    tpu.vector_store %arg6[%c0_4, %c0_5], %5 {strides = array<i32>} : memref<16x256xf32, #tpu.memory_space<vmem>>, vector<16x256xf32>,
    return
  }
  func.func @transform_0(%arg0: i32, %arg1: i32) -> (i32, i32) {
    %c0_i32 = arith.constant 0 : i32
    %c0_i32_0 = arith.constant 0 : i32
    return %arg0, %c0_i32 : i32, i32
  }
  func.func @transform_1(%arg0: i32, %arg1: i32) -> (i32, i32) {
    %c0_i32 = arith.constant 0 : i32
    %c0_i32_0 = arith.constant 0 : i32
    %c0_i32_1 = arith.constant 0 : i32
    return %c0_i32, %c0_i32_0 : i32, i32
  }
  func.func @transform_2(%arg0: i32, %arg1: i32) -> (i32, i32) {
    %c0_i32 = arith.constant 0 : i32
    %c0_i32_0 = arith.constant 0 : i32
    %c0_i32_1 = arith.constant 0 : i32
    return %c0_i32, %c0_i32_0 : i32, i32
  }
  func.func @transform_3(%arg0: i32, %arg1: i32) -> (i32, i32) {
    %c0_i32 = arith.constant 0 : i32
    %c0_i32_0 = arith.constant 0 : i32
    return %c0_i32, %arg1 : i32, i32
  }
  func.func @transform_4(%arg0: i32, %arg1: i32) -> (i32, i32) {
    %c0_i32 = arith.constant 0 : i32
    return %arg0, %arg1 : i32, i32
  }
}

</mosaic_0001>

<llo_original>
// kernel: gpt_geglu_forward.7
$region0: #{gpt_geglu_forward.7}
  #allocation0 [shape = 'u32[]', space=smem, size = 0x4, offset = 0x4, fixed_abs, tag = 'smem constant byte address 0x4 - core index']
  #allocation1 [shape = 'u32[144,128]{1,0:T(1,128)}', space=vmem, size = 0x12000, scoped, tag = 'internal scratch']
  #allocation2 [shape = 'f32[16,32]{1,0:T(8,128)}', space=vmem, size = 0x2000, scoped, tag = 'scratch operand']
  %s0 = inlined_call_operand.vmem [shape: f32[16,32], index: 0, kind: input, shape index: {}]
  %s1 = inlined_call_operand.vmem [shape: f32[1,32], index: 1, kind: input, shape index: {}]
  %s2 = inlined_call_operand.vmem [shape: f32[1,32], index: 2, kind: input, shape index: {}]
  %s3 = inlined_call_operand.vmem [shape: f32[32,96], index: 3, kind: input, shape index: {}]
  %s4 = inlined_call_operand.vmem [shape: f32[16,96], index: 4, kind: output, shape index: {}]
  %s5 = sld [smem:[#allocation0]]
  $region30: #{gpt_geglu_forward.7} parent=0
    _
  %s7 = ssub.s32 1, %s5
  %s8 = scalar_select 0, %s7, %s5
  // Predicated region
  $region2: #{gpt_geglu_forward.7} parent=0 // pred_check
    _
  $region3: #{gpt_geglu_forward.7} parent=0 // pred_check_branch
    %10 = sbr.rel (0) target = $region5
  $region4: #{gpt_geglu_forward.7} parent=0 // pred_region
    _
  $region5: #{gpt_geglu_forward.7} parent=0 // pred_fallthru
    _
  // Predicated region
  $region6: #{gpt_geglu_forward.7} parent=0 // pred_check
    _
  $region7: #{gpt_geglu_forward.7} parent=0 // pred_check_branch
    %12 = sbr.rel (0) target = $region9
  $region8: #{gpt_geglu_forward.7} parent=0 // pred_region
    _
  $region9: #{gpt_geglu_forward.7} parent=0 // pred_fallthru
    _
  // Predicated region
  $region10: #{gpt_geglu_forward.7} parent=0 // pred_check
    _
  $region11: #{gpt_geglu_forward.7} parent=0 // pred_check_branch
    %14 = sbr.rel (0) target = $region13
  $region12: #{gpt_geglu_forward.7} parent=0 // pred_region
    _
  $region13: #{gpt_geglu_forward.7} parent=0 // pred_fallthru
    _
  // Predicated region
  $region14: #{gpt_geglu_forward.7} parent=0 // pred_check
    _
  $region15: #{gpt_geglu_forward.7} parent=0 // pred_check_branch
    %16 = sbr.rel (0) target = $region17
  $region16: #{gpt_geglu_forward.7} parent=0 // pred_region
    _
  $region17: #{gpt_geglu_forward.7} parent=0 // pred_fallthru
    _
  %p17 = scmp.eq.s32.totalorder 0, 0
  // Predicated region
  $region18: #{gpt_geglu_forward.7} parent=0 // pred_check
    %p18 = pneg %p17
  $region19: #{gpt_geglu_forward.7} parent=0 // pred_check_branch
    %20 = sbr.rel (%p18) target = $region21
  $region20: #{gpt_geglu_forward.7} parent=0 // pred_region
    %v21 = vld [vmem:[%s0] sm:$0xff]
    %v22 = vld [vmem:[%s0 + $0x8] sm:$0xff]
    %vm23 = vcmask 261120
    %v24 = vsel %vm23, %v21, 0.0
    %25 = vadd.xlane.f32.xlu0 %v24
    %v26 = vpop.xlane.xlu0 %25
    %v27 = vsel %vm23, %v22, 0.0
    %28 = vadd.xlane.f32.xlu0 %v27
    %v29 = vpop.xlane.xlu0 %28
    %v30 = vrcp.pop 32.0
    %v31 = vmul.f32 %v26, %v30
    %v32 = vmul.f32 %v29, %v30
    %v33 = vsub.f32 %v21, %v31
    %v34 = vsub.f32 %v22, %v32
    %v35 = vmul.f32 %v33, %v33
    %v36 = vmul.f32 %v34, %v34
    %v37 = vsel %vm23, %v35, 0.0
    %38 = vadd.xlane.f32.xlu0 %v37
    %v39 = vpop.xlane.xlu0 %38
    %v40 = vsel %vm23, %v36, 0.0
    %41 = vadd.xlane.f32.xlu0 %v40
    %v42 = vpop.xlane.xlu0 %41
    %v43 = vmul.f32 %v39, %v30
    %v44 = vmul.f32 %v42, %v30
    %v45 = vadd.f32 %v43, 1e-05
    %v46 = vadd.f32 %v44, 1e-05
    %v47 = vrsqrt.pop %v45
    %v48 = vrsqrt.pop %v46
    %v49 = vmul.f32 %v33, %v47
    %v50 = vmul.f32 %v34, %v48
    %v51 = vld [vmem:[%s1] sm:$0x1]
    %v53 = vlaneseq
    %v54 = vshrl.u32 %v53, 7
    %v55 = vsub.s32 0, %v54
    %v56 = vrot.slane %v51, %v55
    %v58 = vmul.f32 %v49, %v56
    %v59 = vmul.f32 %v50, %v56
    %v60 = vld [vmem:[%s2] sm:$0x1]
    %v62 = vlaneseq
    %v63 = vshrl.u32 %v62, 7
    %v64 = vsub.s32 0, %v63
    %v65 = vrot.slane %v60, %v64
    %v67 = vadd.f32 %v58, %v65
    %v68 = vadd.f32 %v59, %v65
    %69 = vst.msk [vmem:[#allocation2] sm:$0xff] %vm23, %v67
    %70 = vst.msk [vmem:[#allocation2 + $0x8] sm:$0xff] %vm23, %v68
  $region21: #{gpt_geglu_forward.7} parent=0 // pred_fallthru
    _
  %v71 = vld [vmem:[#allocation2] sm:$0xff]
  %v72 = vld [vmem:[#allocation2 + $0x8] sm:$0xff]
  %v73 = vld [vmem:[%s3] sm:$0xff]
  %v74 = vld [vmem:[%s3 + $0x8] sm:$0xff]
  %v75 = vld [vmem:[%s3 + $0x10] sm:$0xff]
  %v76 = vld [vmem:[%s3 + $0x18] sm:$0xff]
  %vm77 = vcmask 261120
  %v79 = vsel %vm77, %v71, 0
  %v82 = vsel %vm77, %v72, 0
  %84 = vmatprep.subr.mxu0 0.0
  %85 = vmatpush1.msra.mxu0 0.0
  %86 = vmatprep.subr.mxu0 0.0
  %87 = vmatpush1.msra.mxu0 0.0
  %88 = vmatprep.subr.mxu0 0.0
  %89 = vmatpush1.msra.mxu0 0.0
  %90 = vmatprep.subr.mxu0 0.0
  %91 = vmatpush1.msra.mxu0 0.0
  %92 = vmatprep.subr.mxu0 0.0
  %93 = vmatpush1.msra.mxu0 0.0
  %94 = vmatprep.subr.mxu0 0.0
  %95 = vmatpush1.msra.mxu0 0.0
  %96 = vmatprep.subr.mxu0 0.0
  %97 = vmatpush1.msra.mxu0 0.0
  %98 = vmatprep.subr.mxu0 0.0
  %99 = vmatpush1.msra.mxu0 0.0
  %100 = vmatprep.subr.mxu0 0.0
  %101 = vmatpush1.msra.mxu0 0.0
  %102 = vmatprep.subr.mxu0 0.0
  %103 = vmatpush1.msra.mxu0 0.0
  %104 = vmatprep.subr.mxu0 0.0
  %105 = vmatpush1.msra.mxu0 0.0
  %106 = vmatprep.subr.mxu0 0.0
  %107 = vmatpush1.msra.mxu0 0.0
  %108 = vmatprep.subr.mxu0 0.0
  %109 = vmatpush1.msra.mxu0 %v76
  %110 = vmatprep.subr.mxu0 0.0
  %111 = vmatpush1.msra.mxu0 %v75
  %112 = vmatprep.subr.mxu0 0.0
  %113 = vmatpush1.msra.mxu0 %v74
  %114 = vmatprep.subr.mxu0 0.0
  %115 = vmatpush1.msra.mxu0 %v73
  %116 = vmatprep.subr.mxu0 0.0
  %117 = vmatpush2.msra.mxu0 0.0
  %118 = vmatprep.subr.mxu0 0.0
  %119 = vmatpush2.msra.mxu0 0.0
  %120 = vmatprep.subr.mxu0 0.0
  %121 = vmatpush2.msra.mxu0 0.0
  %122 = vmatprep.subr.mxu0 0.0
  %123 = vmatpush2.msra.mxu0 0.0
  %124 = vmatprep.subr.mxu0 0.0
  %125 = vmatpush2.msra.mxu0 0.0
  %126 = vmatprep.subr.mxu0 0.0
  %127 = vmatpush2.msra.mxu0 0.0
  %128 = vmatprep.subr.mxu0 0.0
  %129 = vmatpush2.msra.mxu0 0.0
  %130 = vmatprep.subr.mxu0 0.0
  %131 = vmatpush2.msra.mxu0 0.0
  %132 = vmatprep.subr.mxu0 0.0
  %133 = vmatpush2.msra.mxu0 0.0
  %134 = vmatprep.subr.mxu0 0.0
  %135 = vmatpush2.msra.mxu0 0.0
  %136 = vmatprep.subr.mxu0 0.0
  %137 = vmatpush2.msra.mxu0 0.0
  %138 = vmatprep.subr.mxu0 0.0
  %139 = vmatpush2.msra.mxu0 0.0
  %140 = vmatprep.subr.mxu0 0.0
  %141 = vmatpush2.msra.mxu0 0.0
  %142 = vmatprep.subr.mxu0 0.0
  %143 = vmatpush2.msra.mxu0 0.0
  %144 = vmatprep.subr.mxu0 0.0
  %145 = vmatpush2.msra.mxu0 0.0
  %146 = vmatprep.subr.mxu0 0.0
  %147 = vmatpush2.msra.mxu0 0.0
  %148 = vmatprep.mubr.f32.mxu0 0.0
  %149 = vmatmul.mubr.f32.gmra.mxu0 %v79
  %v150 = vpop.f32.mrf.mxu0
  %v151 = vadd.f32 0.0, %v150
  %v152 = vpop.f32.mrf.mxu0
  %153 = vmatprep.mubr.f32.mxu0 0.0
  %154 = vmatmul.mubr.f32.gmra.mxu0 %v82
  %v155 = vpop.f32.mrf.mxu0
  %v156 = vadd.f32 0.0, %v155
  %v157 = vpop.f32.mrf.mxu0
  %158 = vdwg.mxu0
  %vm159 = vcmask 785408
  %160 = vst.msk [vmem:[%s4] sm:$0xff] %vm159, %v151
  %161 = vst.msk [vmem:[%s4 + $0x8] sm:$0xff] %vm159, %v156
  // Predicated region
  $region22: #{gpt_geglu_forward.7} parent=0 // pred_check
    _
  $region23: #{gpt_geglu_forward.7} parent=0 // pred_check_branch
    %163 = sbr.rel (0) target = $region25
  $region24: #{gpt_geglu_forward.7} parent=0 // pred_region
    _
  $region25: #{gpt_geglu_forward.7} parent=0 // pred_fallthru
    _
  // Predicated region
  $region26: #{gpt_geglu_forward.7} parent=0 // pred_check
    _
  $region27: #{gpt_geglu_forward.7} parent=0 // pred_check_branch
    %165 = sbr.rel (0) target = $region29
  $region28: #{gpt_geglu_forward.7} parent=0 // pred_region
    _
  $region29: #{gpt_geglu_forward.7} parent=0 // pred_fallthru
    _

// kernel: gpt_geglu_forward.13
$region0: #{gpt_geglu_forward.13}
  #allocation0 [shape = 'u32[]', space=smem, size = 0x4, offset = 0x4, fixed_abs, tag = 'smem constant byte address 0x4 - core index']
  #allocation1 [shape = 'u32[144,128]{1,0:T(1,128)}', space=vmem, size = 0x12000, scoped, tag = 'internal scratch']
  #allocation2 [shape = 'f32[16,32]{1,0:T(8,128)}', space=vmem, size = 0x2000, scoped, tag = 'scratch operand']
  %s0 = inlined_call_operand.vmem [shape: f32[16,32], index: 0, kind: input, shape index: {}]
  %s1 = inlined_call_operand.vmem [shape: f32[1,32], index: 1, kind: input, shape index: {}]
  %s2 = inlined_call_operand.vmem [shape: f32[1,32], index: 2, kind: input, shape index: {}]
  %s3 = inlined_call_operand.vmem [shape: f32[32,256], index: 3, kind: input, shape index: {}]
  %s4 = inlined_call_operand.hbm [shape: f32[16,256], index: 4, kind: output, shape index: {}]
  %s5 = sld [smem:[#allocation0]]
  $region30: #{gpt_geglu_forward.13} parent=0
    _
  %s7 = ssub.s32 1, %s5
  %s8 = scalar_select 0, %s7, %s5
  $region1: #{gpt_geglu_forward.13} parent=0
    #allocation3 [shape = 'u8[16384]{0}', space=vmem, size = 0x4000, scoped, tag = 'output window, operand 0, single buffered']
    #allocation4 [shape = 's32[1]{0}', space=sflag, size = 0x4, scoped, tag = 'scoped memory for gpt_geglu_forward.13']
    %9 = vsyncpa [#allocation4], 0
    // Predicated region
    $region2: #{gpt_geglu_forward.13} parent=1 // pred_check
      _
    $region3: #{gpt_geglu_forward.13} parent=1 // pred_check_branch
      %11 = sbr.rel (0) target = $region5
    $region4: #{gpt_geglu_forward.13} parent=1 // pred_region
      _
    $region5: #{gpt_geglu_forward.13} parent=1 // pred_fallthru
      _
    // Predicated region
    $region6: #{gpt_geglu_forward.13} parent=1 // pred_check
      _
    $region7: #{gpt_geglu_forward.13} parent=1 // pred_check_branch
      %13 = sbr.rel (0) target = $region9
    $region8: #{gpt_geglu_forward.13} parent=1 // pred_region
      _
    $region9: #{gpt_geglu_forward.13} parent=1 // pred_fallthru
      _
    // Predicated region
    $region10: #{gpt_geglu_forward.13} parent=1 // pred_check
      _
    $region11: #{gpt_geglu_forward.13} parent=1 // pred_check_branch
      %15 = sbr.rel (0) target = $region13
    $region12: #{gpt_geglu_forward.13} parent=1 // pred_region
      _
    $region13: #{gpt_geglu_forward.13} parent=1 // pred_fallthru
      _
    // Predicated region
    $region14: #{gpt_geglu_forward.13} parent=1 // pred_check
      _
    $region15: #{gpt_geglu_forward.13} parent=1 // pred_check_branch
      %17 = sbr.rel (0) target = $region17
    $region16: #{gpt_geglu_forward.13} parent=1 // pred_region
      _
    $region17: #{gpt_geglu_forward.13} parent=1 // pred_fallthru
      _
    %p18 = scmp.eq.s32.totalorder 0, 0
    // Predicated region
    $region18: #{gpt_geglu_forward.13} parent=1 // pred_check
      %p19 = pneg %p18
    $region19: #{gpt_geglu_forward.13} parent=1 // pred_check_branch
      %21 = sbr.rel (%p19) target = $region21
    $region20: #{gpt_geglu_forward.13} parent=1 // pred_region
      %v22 = vld [vmem:[%s0] sm:$0xff]
      %v23 = vld [vmem:[%s0 + $0x8] sm:$0xff]
      %vm24 = vcmask 261120
      %v25 = vsel %vm24, %v22, 0.0
      %26 = vadd.xlane.f32.xlu0 %v25
      %v27 = vpop.xlane.xlu0 %26
      %v28 = vsel %vm24, %v23, 0.0
      %29 = vadd.xlane.f32.xlu0 %v28
      %v30 = vpop.xlane.xlu0 %29
      %v31 = vrcp.pop 32.0
      %v32 = vmul.f32 %v27, %v31
      %v33 = vmul.f32 %v30, %v31
      %v34 = vsub.f32 %v22, %v32
      %v35 = vsub.f32 %v23, %v33
      %v36 = vmul.f32 %v34, %v34
      %v37 = vmul.f32 %v35, %v35
      %v38 = vsel %vm24, %v36, 0.0
      %39 = vadd.xlane.f32.xlu0 %v38
      %v40 = vpop.xlane.xlu0 %39
      %v41 = vsel %vm24, %v37, 0.0
      %42 = vadd.xlane.f32.xlu0 %v41
      %v43 = vpop.xlane.xlu0 %42
      %v44 = vmul.f32 %v40, %v31
      %v45 = vmul.f32 %v43, %v31
      %v46 = vadd.f32 %v44, 1e-05
      %v47 = vadd.f32 %v45, 1e-05
      %v48 = vrsqrt.pop %v46
      %v49 = vrsqrt.pop %v47
      %v50 = vmul.f32 %v34, %v48
      %v51 = vmul.f32 %v35, %v49
      %v52 = vld [vmem:[%s1] sm:$0x1]
      %v54 = vlaneseq
      %v55 = vshrl.u32 %v54, 7
      %v56 = vsub.s32 0, %v55
      %v57 = vrot.slane %v52, %v56
      %v59 = vmul.f32 %v50, %v57
      %v60 = vmul.f32 %v51, %v57
      %v61 = vld [vmem:[%s2] sm:$0x1]
      %v63 = vlaneseq
      %v64 = vshrl.u32 %v63, 7
      %v65 = vsub.s32 0, %v64
      %v66 = vrot.slane %v61, %v65
      %v68 = vadd.f32 %v59, %v66
      %v69 = vadd.f32 %v60, %v66
      %70 = vst.msk [vmem:[#allocation2] sm:$0xff] %vm24, %v68
      %71 = vst.msk [vmem:[#allocation2 + $0x8] sm:$0xff] %vm24, %v69
    $region21: #{gpt_geglu_forward.13} parent=1 // pred_fallthru
      _
    %v72 = vld [vmem:[#allocation2] sm:$0xff]
    %v73 = vld [vmem:[#allocation2 + $0x8] sm:$0xff]
    %v74 = vld [vmem:[%s3] sm:$0xff]
    %v75 = vld [vmem:[%s3 + $0x8] sm:$0xff]
    %v76 = vld [vmem:[%s3 + $0x10] sm:$0xff]
    %v77 = vld [vmem:[%s3 + $0x18] sm:$0xff]
    %v78 = vld [vmem:[%s3 + $0x20] sm:$0xff]
    %v79 = vld [vmem:[%s3 + $0x28] sm:$0xff]
    %v80 = vld [vmem:[%s3 + $0x30] sm:$0xff]
    %v81 = vld [vmem:[%s3 + $0x38] sm:$0xff]
    %vm82 = vcmask 261120
    %v84 = vsel %vm82, %v72, 0
    %v87 = vsel %vm82, %v73, 0
    %89 = vmatprep.subr.mxu0 0.0
    %90 = vmatpush1.msra.mxu0 0.0
    %91 = vmatprep.subr.mxu0 0.0
    %92 = vmatpush1.msra.mxu0 0.0
    %93 = vmatprep.subr.mxu0 0.0
    %94 = vmatpush1.msra.mxu0 0.0
    %95 = vmatprep.subr.mxu0 0.0
    %96 = vmatpush1.msra.mxu0 0.0
    %97 = vmatprep.subr.mxu0 0.0
    %98 = vmatpush1.msra.mxu0 0.0
    %99 = vmatprep.subr.mxu0 0.0
    %100 = vmatpush1.msra.mxu0 0.0
    %101 = vmatprep.subr.mxu0 0.0
    %102 = vmatpush1.msra.mxu0 0.0
    %103 = vmatprep.subr.mxu0 0.0
    %104 = vmatpush1.msra.mxu0 0.0
    %105 = vmatprep.subr.mxu0 0.0
    %106 = vmatpush1.msra.mxu0 0.0
    %107 = vmatprep.subr.mxu0 0.0
    %108 = vmatpush1.msra.mxu0 0.0
    %109 = vmatprep.subr.mxu0 0.0
    %110 = vmatpush1.msra.mxu0 0.0
    %111 = vmatprep.subr.mxu0 0.0
    %112 = vmatpush1.msra.mxu0 0.0
    %113 = vmatprep.subr.mxu0 %v81
    %114 = vmatpush1.msra.mxu0 %v80
    %115 = vmatprep.subr.mxu0 %v79
    %116 = vmatpush1.msra.mxu0 %v78
    %117 = vmatprep.subr.mxu0 %v77
    %118 = vmatpush1.msra.mxu0 %v76
    %119 = vmatprep.subr.mxu0 %v75
    %120 = vmatpush1.msra.mxu0 %v74
    %121 = vmatprep.subr.mxu0 0.0
    %122 = vmatpush2.msra.mxu0 0.0
    %123 = vmatprep.subr.mxu0 0.0
    %124 = vmatpush2.msra.mxu0 0.0
    %125 = vmatprep.subr.mxu0 0.0
    %126 = vmatpush2.msra.mxu0 0.0
    %127 = vmatprep.subr.mxu0 0.0
    %128 = vmatpush2.msra.mxu0 0.0
    %129 = vmatprep.subr.mxu0 0.0
    %130 = vmatpush2.msra.mxu0 0.0
    %131 = vmatprep.subr.mxu0 0.0
    %132 = vmatpush2.msra.mxu0 0.0
    %133 = vmatprep.subr.mxu0 0.0
    %134 = vmatpush2.msra.mxu0 0.0
    %135 = vmatprep.subr.mxu0 0.0
    %136 = vmatpush2.msra.mxu0 0.0
    %137 = vmatprep.subr.mxu0 0.0
    %138 = vmatpush2.msra.mxu0 0.0
    %139 = vmatprep.subr.mxu0 0.0
    %140 = vmatpush2.msra.mxu0 0.0
    %141 = vmatprep.subr.mxu0 0.0
    %142 = vmatpush2.msra.mxu0 0.0
    %143 = vmatprep.subr.mxu0 0.0
    %144 = vmatpush2.msra.mxu0 0.0
    %145 = vmatprep.subr.mxu0 0.0
    %146 = vmatpush2.msra.mxu0 0.0
    %147 = vmatprep.subr.mxu0 0.0
    %148 = vmatpush2.msra.mxu0 0.0
    %149 = vmatprep.subr.mxu0 0.0
    %150 = vmatpush2.msra.mxu0 0.0
    %151 = vmatprep.subr.mxu0 0.0
    %152 = vmatpush2.msra.mxu0 0.0
    %153 = vmatprep.mubr.f32.mxu0 0.0
    %154 = vmatmul.mubr.f32.gmra.mxu0 %v84
    %v155 = vpop.f32.mrf.mxu0
    %v156 = vadd.f32 0.0, %v155
    %v157 = vpop.f32.mrf.mxu0
    %v158 = vadd.f32 0.0, %v157
    %159 = vmatprep.mubr.f32.mxu0 0.0
    %160 = vmatmul.mubr.f32.gmra.mxu0 %v87
    %v161 = vpop.f32.mrf.mxu0
    %v162 = vadd.f32 0.0, %v161
    %v163 = vpop.f32.mrf.mxu0
    %v164 = vadd.f32 0.0, %v163
    %165 = vdwg.mxu0
    %166 = vst [vmem:[#allocation3] sm:$0xff] %v156
    %167 = vst [vmem:[#allocation3 + $0x8] sm:$0xff] %v158
    %168 = vst [vmem:[#allocation3 + $0x10] sm:$0xff] %v162
    %169 = vst [vmem:[#allocation3 + $0x18] sm:$0xff] %v164
    // Predicated region
    $region22: #{gpt_geglu_forward.13} parent=1 // pred_check
      _
    $region23: #{gpt_geglu_forward.13} parent=1 // pred_check_branch
      %171 = sbr.rel (0) target = $region25
    $region24: #{gpt_geglu_forward.13} parent=1 // pred_region
      %s173 = ssub.s32 512, 512
      %174 = vsyncadd [#allocation4], %s173
      %s175 = sshll.u32 [#allocation3], 4
      %s176 = int_to_ptr.vmem [resolvable:$true] %s175
      %181 = dma.vmem_to_hbm [thread:$0]  %s176, 512, %s4, [#allocation4], 256, 256, 16
    $region25: #{gpt_geglu_forward.13} parent=1 // pred_fallthru
      _
    // Predicated region
    $region26: #{gpt_geglu_forward.13} parent=1 // pred_check
      _
    $region27: #{gpt_geglu_forward.13} parent=1 // pred_check_branch
      %183 = sbr.rel (0) target = $region29
    $region28: #{gpt_geglu_forward.13} parent=1 // pred_region
      %184 = dma.done [#allocation4], 512
    $region29: #{gpt_geglu_forward.13} parent=1 // pred_fallthru
      _
    %185 = vsyncpa [#allocation4], 1

// kernel: gpt_geglu_forward.8
$region0: #{gpt_geglu_forward.8}
  #allocation0 [shape = 'u32[]', space=smem, size = 0x4, offset = 0x4, fixed_abs, tag = 'smem constant byte address 0x4 - core index']
  #allocation1 [shape = 'u32[144,128]{1,0:T(1,128)}', space=vmem, size = 0x12000, scoped, tag = 'internal scratch']
  %s0 = inlined_call_operand.vmem [shape: f32[2,8,96], index: 0, kind: input, shape index: {}]
  %s1 = inlined_call_operand.vmem [shape: f32[2,1,8], index: 1, kind: input, shape index: {}]
  %s2 = inlined_call_operand.vmem [shape: f32[2,8,32], index: 2, kind: input, shape index: {}]
  %s3 = inlined_call_operand.vmem [shape: f32[32,32], index: 3, kind: input, shape index: {}]
  %s4 = inlined_call_operand.vmem [shape: f32[1,32], index: 4, kind: input, shape index: {}]
  %s5 = inlined_call_operand.vmem [shape: f32[2,8,32], index: 5, kind: output, shape index: {}]
  %s6 = sld [smem:[#allocation0]]
  $region53: #{gpt_geglu_forward.8} parent=0
    _
  %s8 = ssub.s32 1, %s6
  %s9 = scalar_select 0, %s8, %s6
  loop: start=0, step=1, limit=4
  $region2: #{gpt_geglu_forward.8} parent=0 // loop_pre_header
    _
  $region3: #{gpt_geglu_forward.8} parent=0 // loop_header
    %s11 = sphi 0, %s15
    %p12 = scmp.ge.s32.totalorder %s11, 4
    %s21 = sphi 0, %s23
    %s24 = sphi 0, %s21
    %s25 = sphi 0, %s24
    %s41 = sphi 0, %s25
    %s47 = sphi 0, %s49
    %s50 = sphi 0, %s47
    %s51 = sphi 0, %s50
    %s67 = sphi 0, %s51
    %s73 = sphi 0, %s75
    %s76 = sphi 0, %s73
    %s77 = sphi 0, %s76
    %s93 = sphi 0, %s77
    %s97 = sphi 0, %s97
    %s99 = sphi 0, %s97
    %s100 = sphi 0, %s99
    %s114 = sphi 0, %s100
    %s118 = sphi 0, %s118
    %s120 = sphi 0, %s118
    %s121 = sphi 0, %s120
    %s135 = sphi 0, %s121
    %s141 = sphi 0, %s143
    %s144 = sphi 0, %s141
    %s145 = sphi 0, %s144
    %s161 = sphi 0, %s145
  $region4: #{gpt_geglu_forward.8} parent=0 // loop_header_branch
    %14 = sbr.rel (%p12) target = $region8
  $region5: #{gpt_geglu_forward.8} parent=0 // loop_body
    %s16 = ssub.s32 %s11, 1
    %s17 = ssub.s32 %s11, 2
    %s18 = sadd.s32 %s11, 1
    %s19 = ssub.s32 %s11, %s18
    %p20 = scmp.eq.s32.totalorder %s19, 0
    %s22 = sadd.s32 %s21, 1
    %s23 = scalar_select %p20, %s21, %s22
    %p26 = pneg %p20
    %p27 = scmp.eq.s32.totalorder %s11, 1
    %p28 = por %p26, %p27
    %p29 = scmp.ne.s32.totalorder %s21, %s24
    %p30 = scmp.eq.s32.totalorder %s11, 0
    %p31 = por %p29, %p30
    %p32 = scmp.ne.s32.totalorder %s21, %s24
    %p33 = scmp.eq.s32.totalorder %s16, 1
    %p34 = por %p32, %p33
    %p35 = scmp.ne.s32.totalorder %s24, %s25
    %p36 = scmp.eq.s32.totalorder %s16, 0
    %p37 = por %p35, %p36
    %p38 = scmp.ne.s32.totalorder %s24, %s25
    %p39 = scmp.eq.s32.totalorder %s17, 1
    %p40 = por %p38, %p39
    %p42 = scmp.ne.s32.totalorder %s25, %s41
    %p43 = scmp.eq.s32.totalorder %s17, 0
    %p44 = por %p42, %p43
    %s45 = ssub.s32 %s11, %s18
    %p46 = scmp.eq.s32.totalorder %s45, 0
    %s48 = sadd.s32 %s47, 1
    %s49 = scalar_select %p46, %s47, %s48
    %p52 = pneg %p46
    %p53 = scmp.eq.s32.totalorder %s11, 1
    %p54 = por %p52, %p53
    %p55 = scmp.ne.s32.totalorder %s47, %s50
    %p56 = scmp.eq.s32.totalorder %s11, 0
    %p57 = por %p55, %p56
    %p58 = scmp.ne.s32.totalorder %s47, %s50
    %p59 = scmp.eq.s32.totalorder %s16, 1
    %p60 = por %p58, %p59
    %p61 = scmp.ne.s32.totalorder %s50, %s51
    %p62 = scmp.eq.s32.totalorder %s16, 0
    %p63 = por %p61, %p62
    %p64 = scmp.ne.s32.totalorder %s50, %s51
    %p65 = scmp.eq.s32.totalorder %s17, 1
    %p66 = por %p64, %p65
    %p68 = scmp.ne.s32.totalorder %s51, %s67
    %p69 = scmp.eq.s32.totalorder %s17, 0
    %p70 = por %p68, %p69
    %s71 = ssub.s32 %s11, %s18
    %p72 = scmp.eq.s32.totalorder %s71, 0
    %s74 = sadd.s32 %s73, 1
    %s75 = scalar_select %p72, %s73, %s74
    %p78 = pneg %p72
    %p79 = scmp.eq.s32.totalorder %s11, 1
    %p80 = por %p78, %p79
    %p81 = scmp.ne.s32.totalorder %s73, %s76
    %p82 = scmp.eq.s32.totalorder %s11, 0
    %p83 = por %p81, %p82
    %p84 = scmp.ne.s32.totalorder %s73, %s76
    %p85 = scmp.eq.s32.totalorder %s16, 1
    %p86 = por %p84, %p85
    %p87 = scmp.ne.s32.totalorder %s76, %s77
    %p88 = scmp.eq.s32.totalorder %s16, 0
    %p89 = por %p87, %p88
    %p90 = scmp.ne.s32.totalorder %s76, %s77
    %p91 = scmp.eq.s32.totalorder %s17, 1
    %p92 = por %p90, %p91
    %p94 = scmp.ne.s32.totalorder %s77, %s93
    %p95 = scmp.eq.s32.totalorder %s17, 0
    %p96 = por %p94, %p95
    %s98 = sadd.s32 %s97, 1
    %p101 = scmp.eq.s32.totalorder %s11, 1
    %p102 = scmp.ne.s32.totalorder %s97, %s99
    %p103 = scmp.eq.s32.totalorder %s11, 0
    %p104 = por %p102, %p103
    %p105 = scmp.ne.s32.totalorder %s97, %s99
    %p106 = scmp.eq.s32.totalorder %s16, 1
    %p107 = por %p105, %p106
    %p108 = scmp.ne.s32.totalorder %s99, %s100
    %p109 = scmp.eq.s32.totalorder %s16, 0
    %p110 = por %p108, %p109
    %p111 = scmp.ne.s32.totalorder %s99, %s100
    %p112 = scmp.eq.s32.totalorder %s17, 1
    %p113 = por %p111, %p112
    %p115 = scmp.ne.s32.totalorder %s100, %s114
    %p116 = scmp.eq.s32.totalorder %s17, 0
    %p117 = por %p115, %p116
    %s119 = sadd.s32 %s118, 1
    %p122 = scmp.eq.s32.totalorder %s11, 1
    %p123 = scmp.ne.s32.totalorder %s118, %s120
    %p124 = scmp.eq.s32.totalorder %s11, 0
    %p125 = por %p123, %p124
    %p126 = scmp.ne.s32.totalorder %s118, %s120
    %p127 = scmp.eq.s32.totalorder %s16, 1
    %p128 = por %p126, %p127
    %p129 = scmp.ne.s32.totalorder %s120, %s121
    %p130 = scmp.eq.s32.totalorder %s16, 0
    %p131 = por %p129, %p130
    %p132 = scmp.ne.s32.totalorder %s120, %s121
    %p133 = scmp.eq.s32.totalorder %s17, 1
    %p134 = por %p132, %p133
    %p136 = scmp.ne.s32.totalorder %s121, %s135
    %p137 = scmp.eq.s32.totalorder %s17, 0
    %p138 = por %p136, %p137
    %s139 = ssub.s32 %s11, %s18
    %p140 = scmp.eq.s32.totalorder %s139, 0
    %s142 = sadd.s32 %s141, 1
    %s143 = scalar_select %p140, %s141, %s142
    %p146 = pneg %p140
    %p147 = scmp.eq.s32.totalorder %s11, 1
    %p148 = por %p146, %p147
    %p149 = scmp.ne.s32.totalorder %s141, %s144
    %p150 = scmp.eq.s32.totalorder %s11, 0
    %p151 = por %p149, %p150
    %p152 = scmp.ne.s32.totalorder %s141, %s144
    %p153 = scmp.eq.s32.totalorder %s16, 1
    %p154 = por %p152, %p153
    %p155 = scmp.ne.s32.totalorder %s144, %s145
    %p156 = scmp.eq.s32.totalorder %s16, 0
    %p157 = por %p155, %p156
    %p158 = scmp.ne.s32.totalorder %s144, %s145
    %p159 = scmp.eq.s32.totalorder %s17, 1
    %p160 = por %p158, %p159
    %p162 = scmp.ne.s32.totalorder %s145, %s161
    %p163 = scmp.eq.s32.totalorder %s17, 0
    %p164 = por %p162, %p163
    %p165 = scmp.le.s32.totalorder 1, %s11
    %p166 = scmp.lt.s32.totalorder %s11, 3
    %p167 = pnand %p165, %p166
    %p168 = pneg %p167
    // Predicated region
    $region9: #{gpt_geglu_forward.8} parent=5 // pred_check
      _
    $region10: #{gpt_geglu_forward.8} parent=5 // pred_check_branch
      %170 = sbr.rel (%p167) target = $region12
    $region11: #{gpt_geglu_forward.8} parent=5 // pred_region
      %s171 = ssub.s32 %s11, 1
      // Predicated region
      $region13: #{gpt_geglu_forward.8} parent=11 // pred_check
        %p172 = pneg %p110
      $region14: #{gpt_geglu_forward.8} parent=11 // pred_check_branch
        %174 = sbr.rel (%p172) target = $region16
      $region15: #{gpt_geglu_forward.8} parent=11 // pred_region
        _
      $region16: #{gpt_geglu_forward.8} parent=11 // pred_fallthru
        _
      // Predicated region
      $region17: #{gpt_geglu_forward.8} parent=11 // pred_check
        %p175 = pneg %p131
      $region18: #{gpt_geglu_forward.8} parent=11 // pred_check_branch
        %177 = sbr.rel (%p175) target = $region20
      $region19: #{gpt_geglu_forward.8} parent=11 // pred_region
        _
      $region20: #{gpt_geglu_forward.8} parent=11 // pred_fallthru
        _
    $region12: #{gpt_geglu_forward.8} parent=5 // pred_fallthru
      _
    %p178 = scmp.lt.s32.totalorder %s11, 2
    // Predicated region
    $region21: #{gpt_geglu_forward.8} parent=5 // pred_check
      %p179 = pneg %p178
    $region22: #{gpt_geglu_forward.8} parent=5 // pred_check_branch
      %181 = sbr.rel (%p179) target = $region24
    $region23: #{gpt_geglu_forward.8} parent=5 // pred_region
      // Predicated region
      $region25: #{gpt_geglu_forward.8} parent=23 // pred_check
        %p182 = pneg %p31
      $region26: #{gpt_geglu_forward.8} parent=23 // pred_check_branch
        %184 = sbr.rel (%p182) target = $region28
      $region27: #{gpt_geglu_forward.8} parent=23 // pred_region
        %p185 = scmp.lt.s32.totalorder %s11, 1
        %s186 = scalar_select %p185, %s11, 1
        %s187 = smul.addr %s186, 8
        %s188 = scalar_lea.vmem %s0, %s187
      $region28: #{gpt_geglu_forward.8} parent=23 // pred_fallthru
        _
      // Predicated region
      $region29: #{gpt_geglu_forward.8} parent=23 // pred_check
        %p189 = pneg %p57
      $region30: #{gpt_geglu_forward.8} parent=23 // pred_check_branch
        %191 = sbr.rel (%p189) target = $region32
      $region31: #{gpt_geglu_forward.8} parent=23 // pred_region
        %p192 = scmp.lt.s32.totalorder %s11, 1
        %s193 = scalar_select %p192, %s11, 1
        %s194 = scalar_lea.vmem %s1, %s193
      $region32: #{gpt_geglu_forward.8} parent=23 // pred_fallthru
        _
      // Predicated region
      $region33: #{gpt_geglu_forward.8} parent=23 // pred_check
        %p195 = pneg %p83
      $region34: #{gpt_geglu_forward.8} parent=23 // pred_check_branch
        %197 = sbr.rel (%p195) target = $region36
      $region35: #{gpt_geglu_forward.8} parent=23 // pred_region
        %p198 = scmp.lt.s32.totalorder %s11, 1
        %s199 = scalar_select %p198, %s11, 1
        %s200 = smul.addr %s199, 8
        %s201 = scalar_lea.vmem %s2, %s200
      $region36: #{gpt_geglu_forward.8} parent=23 // pred_fallthru
        _
    $region24: #{gpt_geglu_forward.8} parent=5 // pred_fallthru
      _
    %p202 = scmp.le.s32.totalorder 1, %s11
    %p203 = scmp.lt.s32.totalorder %s11, 3
    %p204 = pnand %p202, %p203
    %p205 = pneg %p204
    // Predicated region
    $region37: #{gpt_geglu_forward.8} parent=5 // pred_check
      _
    $region38: #{gpt_geglu_forward.8} parent=5 // pred_check_branch
      %207 = sbr.rel (%p204) target = $region40
    $region39: #{gpt_geglu_forward.8} parent=5 // pred_region
      %s208 = ssub.s32 %s11, 1
      %p209 = scmp.lt.s32.totalorder %s16, 1
      %s210 = scalar_select %p209, %s16, 1
      %s211 = smul.addr %s210, 8
      %s212 = scalar_lea.vmem %s0, %s211
      %p213 = pneg %p37
      %p214 = pneg %p34
      %p215 = scmp.lt.s32.totalorder %s16, 1
      %s216 = scalar_select %p215, %s16, 1
      %s217 = scalar_lea.vmem %s1, %s216
      %p218 = pneg %p63
      %p219 = pneg %p60
      %p220 = scmp.lt.s32.totalorder %s16, 1
      %s221 = scalar_select %p220, %s16, 1
      %s222 = smul.addr %s221, 8
      %s223 = scalar_lea.vmem %s2, %s222
      %p224 = pneg %p89
      %p225 = pneg %p86
      %p226 = pneg %p110
      %p227 = pneg %p107
      %p228 = pneg %p131
      %p229 = pneg %p128
      %p230 = pneg %p157
      %p231 = pneg %p154
      %p232 = scmp.lt.s32.totalorder %s16, 1
      %s233 = scalar_select %p232, %s16, 1
      %s234 = smul.addr %s233, 8
      %s235 = scalar_lea.vmem %s5, %s234
      %p236 = scmp.lt.s32.totalorder %s16, 1
      %s237 = scalar_select %p236, %s16, 1
      %s238 = smul.addr %s237, 8
      %s239 = scalar_lea.vmem %s0, %s238
      %p240 = scmp.lt.s32.totalorder %s16, 1
      %s241 = scalar_select %p240, %s16, 1
      %s242 = scalar_lea.vmem %s1, %s241
      %p243 = scmp.lt.s32.totalorder %s16, 1
      %s244 = scalar_select %p243, %s16, 1
      %s245 = smul.addr %s244, 8
      %s246 = scalar_lea.vmem %s2, %s245
      %p247 = scmp.lt.s32.totalorder %s16, 1
      %s248 = scalar_select %p247, %s16, 1
      %s249 = smul.addr %s248, 8
      %s250 = scalar_lea.vmem %s5, %s249
      %v251 = vld [vmem:[%s239] sm:$0xff]
      %v252 = vmul.f32 %v251, 0.35355338
      %v253 = vld [vmem:[%s242] sm:$0x1]
      %vm254 = vcmp.gt.f32.partialorder %v253, 0.5
      %v255 = vlaneseq
      %v256 = vshrl.u32 %v255, 7
      %v257 = vlaneseq
      %v258 = vand.u32 %v257, 127
      %vm259 = vcmp.le.s32.totalorder %v258, %v256
      %v260 = vsel %vm254, 1, 0
      %v261 = vlaneseq
      %v262 = vshrl.u32 %v261, 7
      %v263 = vsub.s32 0, %v262
      %v264 = vrot.slane %v260, %v263
      %vm265 = vcmp.eq.s32.totalorder %v264, 1
      %vm266 = vmand %vm259, %vm265
      %v267 = vsel %vm266, 0.0, -1e+30
      %269 = vrot.lane.b32.xlu0 %v251, 96
      %v270 = vpop.permute.xlu0 %269
      %vm271 = vcmask 64512
      %v273 = vsel %vm271, %v252, 0
      %v275 = vsel %vm271, %v270, 0
      %277 = vmatprep.subr.mxu0 0.0
      %278 = vmatpush1.xpose.msra.mxu0 0.0
      %279 = vmatprep.subr.mxu0 0.0
      %280 = vmatpush1.xpose.msra.mxu0 0.0
      %281 = vmatprep.subr.mxu0 0.0
      %282 = vmatpush1.xpose.msra.mxu0 0.0
      %283 = vmatprep.subr.mxu0 0.0
      %284 = vmatpush1.xpose.msra.mxu0 0.0
      %285 = vmatprep.subr.mxu0 0.0
      %286 = vmatpush1.xpose.msra.mxu0 0.0
      %287 = vmatprep.subr.mxu0 0.0
      %288 = vmatpush1.xpose.msra.mxu0 0.0
      %289 = vmatprep.subr.mxu0 0.0
      %290 = vmatpush1.xpose.msra.mxu0 0.0
      %291 = vmatprep.subr.mxu0 0.0
      %292 = vmatpush1.xpose.msra.mxu0 0.0
      %293 = vmatprep.subr.mxu0 0.0
      %294 = vmatpush1.xpose.msra.mxu0 0.0
      %295 = vmatprep.subr.mxu0 0.0
      %296 = vmatpush1.xpose.msra.mxu0 0.0
      %297 = vmatprep.subr.mxu0 0.0
      %298 = vmatpush1.xpose.msra.mxu0 0.0
      %299 = vmatprep.subr.mxu0 0.0
      %300 = vmatpush1.xpose.msra.mxu0 0.0
      %301 = vmatprep.subr.mxu0 0.0
      %302 = vmatpush1.xpose.msra.mxu0 0.0
      %303 = vmatprep.subr.mxu0 0.0
      %304 = vmatpush1.xpose.msra.mxu0 0.0
      %305 = vmatprep.subr.mxu0 0.0
      %306 = vmatpush1.xpose.msra.mxu0 0.0
      %307 = vmatprep.subr.mxu0 0.0
      %308 = vmatpush1.xpose.msra.mxu0 %v275
      %309 = vmatprep.subr.mxu0 0.0
      %310 = vmatpush2.xpose.msra.mxu0 0.0
      %311 = vmatprep.subr.mxu0 0.0
      %312 = vmatpush2.xpose.msra.mxu0 0.0
      %313 = vmatprep.subr.mxu0 0.0
      %314 = vmatpush2.xpose.msra.mxu0 0.0
      %315 = vmatprep.subr.mxu0 0.0
      %316 = vmatpush2.xpose.msra.mxu0 0.0
      %317 = vmatprep.subr.mxu0 0.0
      %318 = vmatpush2.xpose.msra.mxu0 0.0
      %319 = vmatprep.subr.mxu0 0.0
      %320 = vmatpush2.xpose.msra.mxu0 0.0
      %321 = vmatprep.subr.mxu0 0.0
      %322 = vmatpush2.xpose.msra.mxu0 0.0
      %323 = vmatprep.subr.mxu0 0.0
      %324 = vmatpush2.xpose.msra.mxu0 0.0
      %325 = vmatprep.subr.mxu0 0.0
      %326 = vmatpush2.xpose.msra.mxu0 0.0
      %327 = vmatprep.subr.mxu0 0.0
      %328 = vmatpush2.xpose.msra.mxu0 0.0
      %329 = vmatprep.subr.mxu0 0.0
      %330 = vmatpush2.xpose.msra.mxu0 0.0
      %331 = vmatprep.subr.mxu0 0.0
      %332 = vmatpush2.xpose.msra.mxu0 0.0
      %333 = vmatprep.subr.mxu0 0.0
      %334 = vmatpush2.xpose.msra.mxu0 0.0
      %335 = vmatprep.subr.mxu0 0.0
      %336 = vmatpush2.xpose.msra.mxu0 0.0
      %337 = vmatprep.subr.mxu0 0.0
      %338 = vmatpush2.xpose.msra.mxu0 0.0
      %339 = vmatprep.subr.mxu0 0.0
      %340 = vmatpush2.xpose.msra.mxu0 0.0
      %341 = vmatprep.mubr.f32.mxu0 0.0
      %342 = vmatmul.mubr.f32.gmra.mxu0 %v273
      %v343 = vpop.f32.mrf.mxu0
      %v344 = vadd.f32 %v267, %v343
      %v345 = vpop.f32.mrf.mxu0
      %346 = vdwg.mxu0
      %v347 = vsel %vm271, %v344, -inf
      %348 = vmax.xlane.f32.xlu0 %v347
      %v349 = vpop.xlane.xlu0 %348
      %v350 = vsub.f32 %v344, %v349
      %v351 = vmul.f32 %v350, 1.442695
      %v352 = vpow.pop %v351
      %v353 = vsel %vm271, %v352, 0.0
      %354 = vadd.xlane.f32.xlu0 %v353
      %v355 = vpop.xlane.xlu0 %354
      %v356 = vrcp.pop %v355
      %v357 = vmul.f32 %v352, %v356
      %358 = vrot.lane.b32.xlu0 %v251, 64
      %v359 = vpop.permute.xlu0 %358
      %v362 = vsel %vm271, %v357, 0
      %364 = vmatprep.subr.mxu0 0.0
      %365 = vmatpush1.msra.mxu0 0.0
      %366 = vmatprep.subr.mxu0 0.0
      %367 = vmatpush1.msra.mxu0 0.0
      %368 = vmatprep.subr.mxu0 0.0
      %369 = vmatpush1.msra.mxu0 0.0
      %370 = vmatprep.subr.mxu0 0.0
      %371 = vmatpush1.msra.mxu0 0.0
      %372 = vmatprep.subr.mxu0 0.0
      %373 = vmatpush1.msra.mxu0 0.0
      %374 = vmatprep.subr.mxu0 0.0
      %375 = vmatpush1.msra.mxu0 0.0
      %376 = vmatprep.subr.mxu0 0.0
      %377 = vmatpush1.msra.mxu0 0.0
      %378 = vmatprep.subr.mxu0 0.0
      %379 = vmatpush1.msra.mxu0 0.0
      %380 = vmatprep.subr.mxu0 0.0
      %381 = vmatpush1.msra.mxu0 0.0
      %382 = vmatprep.subr.mxu0 0.0
      %383 = vmatpush1.msra.mxu0 0.0
      %384 = vmatprep.subr.mxu0 0.0
      %385 = vmatpush1.msra.mxu0 0.0
      %386 = vmatprep.subr.mxu0 0.0
      %387 = vmatpush1.msra.mxu0 0.0
      %388 = vmatprep.subr.mxu0 0.0
      %389 = vmatpush1.msra.mxu0 0.0
      %390 = vmatprep.subr.mxu0 0.0
      %391 = vmatpush1.msra.mxu0 0.0
      %392 = vmatprep.subr.mxu0 0.0
      %393 = vmatpush1.msra.mxu0 0.0
      %394 = vmatprep.subr.mxu0 0.0
      %395 = vmatpush1.msra.mxu0 %v359
      %396 = vmatprep.subr.mxu0 0.0
      %397 = vmatpush2.msra.mxu0 0.0
      %398 = vmatprep.subr.mxu0 0.0
      %399 = vmatpush2.msra.mxu0 0.0
      %400 = vmatprep.subr.mxu0 0.0
      %401 = vmatpush2.msra.mxu0 0.0
      %402 = vmatprep.subr.mxu0 0.0
      %403 = vmatpush2.msra.mxu0 0.0
      %404 = vmatprep.subr.mxu0 0.0
      %405 = vmatpush2.msra.mxu0 0.0
      %406 = vmatprep.subr.mxu0 0.0
      %407 = vmatpush2.msra.mxu0 0.0
      %408 = vmatprep.subr.mxu0 0.0
      %409 = vmatpush2.msra.mxu0 0.0
      %410 = vmatprep.subr.mxu0 0.0
      %411 = vmatpush2.msra.mxu0 0.0
      %412 = vmatprep.subr.mxu0 0.0
      %413 = vmatpush2.msra.mxu0 0.0
      %414 = vmatprep.subr.mxu0 0.0
      %415 = vmatpush2.msra.mxu0 0.0
      %416 = vmatprep.subr.mxu0 0.0
      %417 = vmatpush2.msra.mxu0 0.0
      %418 = vmatprep.subr.mxu0 0.0
      %419 = vmatpush2.msra.mxu0 0.0
      %420 = vmatprep.subr.mxu0 0.0
      %421 = vmatpush2.msra.mxu0 0.0
      %422 = vmatprep.subr.mxu0 0.0
      %423 = vmatpush2.msra.mxu0 0.0
      %424 = vmatprep.subr.mxu0 0.0
      %425 = vmatpush2.msra.mxu0 0.0
      %426 = vmatprep.subr.mxu0 0.0
      %427 = vmatpush2.msra.mxu0 0.0
      %428 = vmatprep.mubr.f32.mxu0 0.0
      %429 = vmatmul.mubr.f32.gmra.mxu0 %v362
      %v430 = vpop.f32.mrf.mxu0
      %v431 = vadd.f32 0.0, %v430
      %v432 = vpop.f32.mrf.mxu0
      %433 = vdwg.mxu0
      %434 = vrot.lane.b32.xlu0 %v252, 120
      %v435 = vpop.permute.xlu0 %434
      %436 = vrot.lane.b32.xlu0 %v251, 88
      %v437 = vpop.permute.xlu0 %436
      %v438 = vsel %vm271, %v435, 0
      %v440 = vsel %vm271, %v437, 0
      %442 = vmatprep.subr.mxu0 0.0
      %443 = vmatpush1.xpose.msra.mxu0 0.0
      %444 = vmatprep.subr.mxu0 0.0
      %445 = vmatpush1.xpose.msra.mxu0 0.0
      %446 = vmatprep.subr.mxu0 0.0
      %447 = vmatpush1.xpose.msra.mxu0 0.0
      %448 = vmatprep.subr.mxu0 0.0
      %449 = vmatpush1.xpose.msra.mxu0 0.0
      %450 = vmatprep.subr.mxu0 0.0
      %451 = vmatpush1.xpose.msra.mxu0 0.0
      %452 = vmatprep.subr.mxu0 0.0
      %453 = vmatpush1.xpose.msra.mxu0 0.0
      %454 = vmatprep.subr.mxu0 0.0
      %455 = vmatpush1.xpose.msra.mxu0 0.0
      %456 = vmatprep.subr.mxu0 0.0
      %457 = vmatpush1.xpose.msra.mxu0 0.0
      %458 = vmatprep.subr.mxu0 0.0
      %459 = vmatpush1.xpose.msra.mxu0 0.0
      %460 = vmatprep.subr.mxu0 0.0
      %461 = vmatpush1.xpose.msra.mxu0 0.0
      %462 = vmatprep.subr.mxu0 0.0
      %463 = vmatpush1.xpose.msra.mxu0 0.0
      %464 = vmatprep.subr.mxu0 0.0
      %465 = vmatpush1.xpose.msra.mxu0 0.0
      %466 = vmatprep.subr.mxu0 0.0
      %467 = vmatpush1.xpose.msra.mxu0 0.0
      %468 = vmatprep.subr.mxu0 0.0
      %469 = vmatpush1.xpose.msra.mxu0 0.0
      %470 = vmatprep.subr.mxu0 0.0
      %471 = vmatpush1.xpose.msra.mxu0 0.0
      %472 = vmatprep.subr.mxu0 0.0
      %473 = vmatpush1.xpose.msra.mxu0 %v440
      %474 = vmatprep.subr.mxu0 0.0
      %475 = vmatpush2.xpose.msra.mxu0 0.0
      %476 = vmatprep.subr.mxu0 0.0
      %477 = vmatpush2.xpose.msra.mxu0 0.0
      %478 = vmatprep.subr.mxu0 0.0
      %479 = vmatpush2.xpose.msra.mxu0 0.0
      %480 = vmatprep.subr.mxu0 0.0
      %481 = vmatpush2.xpose.msra.mxu0 0.0
      %482 = vmatprep.subr.mxu0 0.0
      %483 = vmatpush2.xpose.msra.mxu0 0.0
      %484 = vmatprep.subr.mxu0 0.0
      %485 = vmatpush2.xpose.msra.mxu0 0.0
      %486 = vmatprep.subr.mxu0 0.0
      %487 = vmatpush2.xpose.msra.mxu0 0.0
      %488 = vmatprep.subr.mxu0 0.0
      %489 = vmatpush2.xpose.msra.mxu0 0.0
      %490 = vmatprep.subr.mxu0 0.0
      %491 = vmatpush2.xpose.msra.mxu0 0.0
      %492 = vmatprep.subr.mxu0 0.0
      %493 = vmatpush2.xpose.msra.mxu0 0.0
      %494 = vmatprep.subr.mxu0 0.0
      %495 = vmatpush2.xpose.msra.mxu0 0.0
      %496 = vmatprep.subr.mxu0 0.0
      %497 = vmatpush2.xpose.msra.mxu0 0.0
      %498 = vmatprep.subr.mxu0 0.0
      %499 = vmatpush2.xpose.msra.mxu0 0.0
      %500 = vmatprep.subr.mxu0 0.0
      %501 = vmatpush2.xpose.msra.mxu0 0.0
      %502 = vmatprep.subr.mxu0 0.0
      %503 = vmatpush2.xpose.msra.mxu0 0.0
      %504 = vmatprep.subr.mxu0 0.0
      %505 = vmatpush2.xpose.msra.mxu0 0.0
      %506 = vmatprep.mubr.f32.mxu0 0.0
      %507 = vmatmul.mubr.f32.gmra.mxu0 %v438
      %v508 = vpop.f32.mrf.mxu0
      %v509 = vadd.f32 %v267, %v508
      %v510 = vpop.f32.mrf.mxu0
      %511 = vdwg.mxu0
      %v512 = vsel %vm271, %v509, -inf
      %513 = vmax.xlane.f32.xlu0 %v512
      %v514 = vpop.xlane.xlu0 %513
      %v515 = vsub.f32 %v509, %v514
      %v516 = vmul.f32 %v515, 1.442695
      %v517 = vpow.pop %v516
      %v518 = vsel %vm271, %v517, 0.0
      %519 = vadd.xlane.f32.xlu0 %v518
      %v520 = vpop.xlane.xlu0 %519
      %v521 = vrcp.pop %v520
      %v522 = vmul.f32 %v517, %v521
      %523 = vrot.lane.b32.xlu0 %v251, 56
      %v524 = vpop.permute.xlu0 %523
      %v527 = vsel %vm271, %v522, 0
      %529 = vmatprep.subr.mxu0 0.0
      %530 = vmatpush1.msra.mxu0 0.0
      %531 = vmatprep.subr.mxu0 0.0
      %532 = vmatpush1.msra.mxu0 0.0
      %533 = vmatprep.subr.mxu0 0.0
      %534 = vmatpush1.msra.mxu0 0.0
      %535 = vmatprep.subr.mxu0 0.0
      %536 = vmatpush1.msra.mxu0 0.0
      %537 = vmatprep.subr.mxu0 0.0
      %538 = vmatpush1.msra.mxu0 0.0
      %539 = vmatprep.subr.mxu0 0.0
      %540 = vmatpush1.msra.mxu0 0.0
      %541 = vmatprep.subr.mxu0 0.0
      %542 = vmatpush1.msra.mxu0 0.0
      %543 = vmatprep.subr.mxu0 0.0
      %544 = vmatpush1.msra.mxu0 0.0
      %545 = vmatprep.subr.mxu0 0.0
      %546 = vmatpush1.msra.mxu0 0.0
      %547 = vmatprep.subr.mxu0 0.0
      %548 = vmatpush1.msra.mxu0 0.0
      %549 = vmatprep.subr.mxu0 0.0
      %550 = vmatpush1.msra.mxu0 0.0
      %551 = vmatprep.subr.mxu0 0.0
      %552 = vmatpush1.msra.mxu0 0.0
      %553 = vmatprep.subr.mxu0 0.0
      %554 = vmatpush1.msra.mxu0 0.0
      %555 = vmatprep.subr.mxu0 0.0
      %556 = vmatpush1.msra.mxu0 0.0
      %557 = vmatprep.subr.mxu0 0.0
      %558 = vmatpush1.msra.mxu0 0.0
      %559 = vmatprep.subr.mxu0 0.0
      %560 = vmatpush1.msra.mxu0 %v524
      %561 = vmatprep.subr.mxu0 0.0
      %562 = vmatpush2.msra.mxu0 0.0
      %563 = vmatprep.subr.mxu0 0.0
      %564 = vmatpush2.msra.mxu0 0.0
      %565 = vmatprep.subr.mxu0 0.0
      %566 = vmatpush2.msra.mxu0 0.0
      %567 = vmatprep.subr.mxu0 0.0
      %568 = vmatpush2.msra.mxu0 0.0
      %569 = vmatprep.subr.mxu0 0.0
      %570 = vmatpush2.msra.mxu0 0.0
      %571 = vmatprep.subr.mxu0 0.0
      %572 = vmatpush2.msra.mxu0 0.0
      %573 = vmatprep.subr.mxu0 0.0
      %574 = vmatpush2.msra.mxu0 0.0
      %575 = vmatprep.subr.mxu0 0.0
      %576 = vmatpush2.msra.mxu0 0.0
      %577 = vmatprep.subr.mxu0 0.0
      %578 = vmatpush2.msra.mxu0 0.0
      %579 = vmatprep.subr.mxu0 0.0
      %580 = vmatpush2.msra.mxu0 0.0
      %581 = vmatprep.subr.mxu0 0.0
      %582 = vmatpush2.msra.mxu0 0.0
      %583 = vmatprep.subr.mxu0 0.0
      %584 = vmatpush2.msra.mxu0 0.0
      %585 = vmatprep.subr.mxu0 0.0
      %586 = vmatpush2.msra.mxu0 0.0
      %587 = vmatprep.subr.mxu0 0.0
      %588 = vmatpush2.msra.mxu0 0.0
      %589 = vmatprep.subr.mxu0 0.0
      %590 = vmatpush2.msra.mxu0 0.0
      %591 = vmatprep.subr.mxu0 0.0
      %592 = vmatpush2.msra.mxu0 0.0
      %593 = vmatprep.mubr.f32.mxu0 0.0
      %594 = vmatmul.mubr.f32.gmra.mxu0 %v527
      %v595 = vpop.f32.mrf.mxu0
      %v596 = vadd.f32 0.0, %v595
      %v597 = vpop.f32.mrf.mxu0
      %598 = vdwg.mxu0
      %599 = vrot.lane.b32.xlu0 %v252, 112
      %v600 = vpop.permute.xlu0 %599
      %601 = vrot.lane.b32.xlu0 %v251, 80
      %v602 = vpop.permute.xlu0 %601
      %v603 = vsel %vm271, %v600, 0
      %v605 = vsel %vm271, %v602, 0
      %607 = vmatprep.subr.mxu0 0.0
      %608 = vmatpush1.xpose.msra.mxu0 0.0
      %609 = vmatprep.subr.mxu0 0.0
      %610 = vmatpush1.xpose.msra.mxu0 0.0
      %611 = vmatprep.subr.mxu0 0.0
      %612 = vmatpush1.xpose.msra.mxu0 0.0
      %613 = vmatprep.subr.mxu0 0.0
      %614 = vmatpush1.xpose.msra.mxu0 0.0
      %615 = vmatprep.subr.mxu0 0.0
      %616 = vmatpush1.xpose.msra.mxu0 0.0
      %617 = vmatprep.subr.mxu0 0.0
      %618 = vmatpush1.xpose.msra.mxu0 0.0
      %619 = vmatprep.subr.mxu0 0.0
      %620 = vmatpush1.xpose.msra.mxu0 0.0
      %621 = vmatprep.subr.mxu0 0.0
      %622 = vmatpush1.xpose.msra.mxu0 0.0
      %623 = vmatprep.subr.mxu0 0.0
      %624 = vmatpush1.xpose.msra.mxu0 0.0
      %625 = vmatprep.subr.mxu0 0.0
      %626 = vmatpush1.xpose.msra.mxu0 0.0
      %627 = vmatprep.subr.mxu0 0.0
      %628 = vmatpush1.xpose.msra.mxu0 0.0
      %629 = vmatprep.subr.mxu0 0.0
      %630 = vmatpush1.xpose.msra.mxu0 0.0
      %631 = vmatprep.subr.mxu0 0.0
      %632 = vmatpush1.xpose.msra.mxu0 0.0
      %633 = vmatprep.subr.mxu0 0.0
      %634 = vmatpush1.xpose.msra.mxu0 0.0
      %635 = vmatprep.subr.mxu0 0.0
      %636 = vmatpush1.xpose.msra.mxu0 0.0
      %637 = vmatprep.subr.mxu0 0.0
      %638 = vmatpush1.xpose.msra.mxu0 %v605
      %639 = vmatprep.subr.mxu0 0.0
      %640 = vmatpush2.xpose.msra.mxu0 0.0
      %641 = vmatprep.subr.mxu0 0.0
      %642 = vmatpush2.xpose.msra.mxu0 0.0
      %643 = vmatprep.subr.mxu0 0.0
      %644 = vmatpush2.xpose.msra.mxu0 0.0
      %645 = vmatprep.subr.mxu0 0.0
      %646 = vmatpush2.xpose.msra.mxu0 0.0
      %647 = vmatprep.subr.mxu0 0.0
      %648 = vmatpush2.xpose.msra.mxu0 0.0
      %649 = vmatprep.subr.mxu0 0.0
      %650 = vmatpush2.xpose.msra.mxu0 0.0
      %651 = vmatprep.subr.mxu0 0.0
      %652 = vmatpush2.xpose.msra.mxu0 0.0
      %653 = vmatprep.subr.mxu0 0.0
      %654 = vmatpush2.xpose.msra.mxu0 0.0
      %655 = vmatprep.subr.mxu0 0.0
      %656 = vmatpush2.xpose.msra.mxu0 0.0
      %657 = vmatprep.subr.mxu0 0.0
      %658 = vmatpush2.xpose.msra.mxu0 0.0
      %659 = vmatprep.subr.mxu0 0.0
      %660 = vmatpush2.xpose.msra.mxu0 0.0
      %661 = vmatprep.subr.mxu0 0.0
      %662 = vmatpush2.xpose.msra.mxu0 0.0
      %663 = vmatprep.subr.mxu0 0.0
      %664 = vmatpush2.xpose.msra.mxu0 0.0
      %665 = vmatprep.subr.mxu0 0.0
      %666 = vmatpush2.xpose.msra.mxu0 0.0
      %667 = vmatprep.subr.mxu0 0.0
      %668 = vmatpush2.xpose.msra.mxu0 0.0
      %669 = vmatprep.subr.mxu0 0.0
      %670 = vmatpush2.xpose.msra.mxu0 0.0
      %671 = vmatprep.mubr.f32.mxu0 0.0
      %672 = vmatmul.mubr.f32.gmra.mxu0 %v603
      %v673 = vpop.f32.mrf.mxu0
      %v674 = vadd.f32 %v267, %v673
      %v675 = vpop.f32.mrf.mxu0
      %676 = vdwg.mxu0
      %v677 = vsel %vm271, %v674, -inf
      %678 = vmax.xlane.f32.xlu0 %v677
      %v679 = vpop.xlane.xlu0 %678
      %v680 = vsub.f32 %v674, %v679
      %v681 = vmul.f32 %v680, 1.442695
      %v682 = vpow.pop %v681
      %v683 = vsel %vm271, %v682, 0.0
      %684 = vadd.xlane.f32.xlu0 %v683
      %v685 = vpop.xlane.xlu0 %684
      %v686 = vrcp.pop %v685
      %v687 = vmul.f32 %v682, %v686
      %688 = vrot.lane.b32.xlu0 %v251, 48
      %v689 = vpop.permute.xlu0 %688
      %v692 = vsel %vm271, %v687, 0
      %694 = vmatprep.subr.mxu0 0.0
      %695 = vmatpush1.msra.mxu0 0.0
      %696 = vmatprep.subr.mxu0 0.0
      %697 = vmatpush1.msra.mxu0 0.0
      %698 = vmatprep.subr.mxu0 0.0
      %699 = vmatpush1.msra.mxu0 0.0
      %700 = vmatprep.subr.mxu0 0.0
      %701 = vmatpush1.msra.mxu0 0.0
      %702 = vmatprep.subr.mxu0 0.0
      %703 = vmatpush1.msra.mxu0 0.0
      %704 = vmatprep.subr.mxu0 0.0
      %705 = vmatpush1.msra.mxu0 0.0
      %706 = vmatprep.subr.mxu0 0.0
      %707 = vmatpush1.msra.mxu0 0.0
      %708 = vmatprep.subr.mxu0 0.0
      %709 = vmatpush1.msra.mxu0 0.0
      %710 = vmatprep.subr.mxu0 0.0
      %711 = vmatpush1.msra.mxu0 0.0
      %712 = vmatprep.subr.mxu0 0.0
      %713 = vmatpush1.msra.mxu0 0.0
      %714 = vmatprep.subr.mxu0 0.0
      %715 = vmatpush1.msra.mxu0 0.0
      %716 = vmatprep.subr.mxu0 0.0
      %717 = vmatpush1.msra.mxu0 0.0
      %718 = vmatprep.subr.mxu0 0.0
      %719 = vmatpush1.msra.mxu0 0.0
      %720 = vmatprep.subr.mxu0 0.0
      %721 = vmatpush1.msra.mxu0 0.0
      %722 = vmatprep.subr.mxu0 0.0
      %723 = vmatpush1.msra.mxu0 0.0
      %724 = vmatprep.subr.mxu0 0.0
      %725 = vmatpush1.msra.mxu0 %v689
      %726 = vmatprep.subr.mxu0 0.0
      %727 = vmatpush2.msra.mxu0 0.0
      %728 = vmatprep.subr.mxu0 0.0
      %729 = vmatpush2.msra.mxu0 0.0
      %730 = vmatprep.subr.mxu0 0.0
      %731 = vmatpush2.msra.mxu0 0.0
      %732 = vmatprep.subr.mxu0 0.0
      %733 = vmatpush2.msra.mxu0 0.0
      %734 = vmatprep.subr.mxu0 0.0
      %735 = vmatpush2.msra.mxu0 0.0
      %736 = vmatprep.subr.mxu0 0.0
      %737 = vmatpush2.msra.mxu0 0.0
      %738 = vmatprep.subr.mxu0 0.0
      %739 = vmatpush2.msra.mxu0 0.0
      %740 = vmatprep.subr.mxu0 0.0
      %741 = vmatpush2.msra.mxu0 0.0
      %742 = vmatprep.subr.mxu0 0.0
      %743 = vmatpush2.msra.mxu0 0.0
      %744 = vmatprep.subr.mxu0 0.0
      %745 = vmatpush2.msra.mxu0 0.0
      %746 = vmatprep.subr.mxu0 0.0
      %747 = vmatpush2.msra.mxu0 0.0
      %748 = vmatprep.subr.mxu0 0.0
      %749 = vmatpush2.msra.mxu0 0.0
      %750 = vmatprep.subr.mxu0 0.0
      %751 = vmatpush2.msra.mxu0 0.0
      %752 = vmatprep.subr.mxu0 0.0
      %753 = vmatpush2.msra.mxu0 0.0
      %754 = vmatprep.subr.mxu0 0.0
      %755 = vmatpush2.msra.mxu0 0.0
      %756 = vmatprep.subr.mxu0 0.0
      %757 = vmatpush2.msra.mxu0 0.0
      %758 = vmatprep.mubr.f32.mxu0 0.0
      %759 = vmatmul.mubr.f32.gmra.mxu0 %v692
      %v760 = vpop.f32.mrf.mxu0
      %v761 = vadd.f32 0.0, %v760
      %v762 = vpop.f32.mrf.mxu0
      %763 = vdwg.mxu0
      %764 = vrot.lane.b32.xlu0 %v252, 104
      %v765 = vpop.permute.xlu0 %764
      %766 = vrot.lane.b32.xlu0 %v251, 72
      %v767 = vpop.permute.xlu0 %766
      %v768 = vsel %vm271, %v765, 0
      %v770 = vsel %vm271, %v767, 0
      %772 = vmatprep.subr.mxu0 0.0
      %773 = vmatpush1.xpose.msra.mxu0 0.0
      %774 = vmatprep.subr.mxu0 0.0
      %775 = vmatpush1.xpose.msra.mxu0 0.0
      %776 = vmatprep.subr.mxu0 0.0
      %777 = vmatpush1.xpose.msra.mxu0 0.0
      %778 = vmatprep.subr.mxu0 0.0
      %779 = vmatpush1.xpose.msra.mxu0 0.0
      %780 = vmatprep.subr.mxu0 0.0
      %781 = vmatpush1.xpose.msra.mxu0 0.0
      %782 = vmatprep.subr.mxu0 0.0
      %783 = vmatpush1.xpose.msra.mxu0 0.0
      %784 = vmatprep.subr.mxu0 0.0
      %785 = vmatpush1.xpose.msra.mxu0 0.0
      %786 = vmatprep.subr.mxu0 0.0
      %787 = vmatpush1.xpose.msra.mxu0 0.0
      %788 = vmatprep.subr.mxu0 0.0
      %789 = vmatpush1.xpose.msra.mxu0 0.0
      %790 = vmatprep.subr.mxu0 0.0
      %791 = vmatpush1.xpose.msra.mxu0 0.0
      %792 = vmatprep.subr.mxu0 0.0
      %793 = vmatpush1.xpose.msra.mxu0 0.0
      %794 = vmatprep.subr.mxu0 0.0
      %795 = vmatpush1.xpose.msra.mxu0 0.0
      %796 = vmatprep.subr.mxu0 0.0
      %797 = vmatpush1.xpose.msra.mxu0 0.0
      %798 = vmatprep.subr.mxu0 0.0
      %799 = vmatpush1.xpose.msra.mxu0 0.0
      %800 = vmatprep.subr.mxu0 0.0
      %801 = vmatpush1.xpose.msra.mxu0 0.0
      %802 = vmatprep.subr.mxu0 0.0
      %803 = vmatpush1.xpose.msra.mxu0 %v770
      %804 = vmatprep.subr.mxu0 0.0
      %805 = vmatpush2.xpose.msra.mxu0 0.0
      %806 = vmatprep.subr.mxu0 0.0
      %807 = vmatpush2.xpose.msra.mxu0 0.0
      %808 = vmatprep.subr.mxu0 0.0
      %809 = vmatpush2.xpose.msra.mxu0 0.0
      %810 = vmatprep.subr.mxu0 0.0
      %811 = vmatpush2.xpose.msra.mxu0 0.0
      %812 = vmatprep.subr.mxu0 0.0
      %813 = vmatpush2.xpose.msra.mxu0 0.0
      %814 = vmatprep.subr.mxu0 0.0
      %815 = vmatpush2.xpose.msra.mxu0 0.0
      %816 = vmatprep.subr.mxu0 0.0
      %817 = vmatpush2.xpose.msra.mxu0 0.0
      %818 = vmatprep.subr.mxu0 0.0
      %819 = vmatpush2.xpose.msra.mxu0 0.0
      %820 = vmatprep.subr.mxu0 0.0
      %821 = vmatpush2.xpose.msra.mxu0 0.0
      %822 = vmatprep.subr.mxu0 0.0
      %823 = vmatpush2.xpose.msra.mxu0 0.0
      %824 = vmatprep.subr.mxu0 0.0
      %825 = vmatpush2.xpose.msra.mxu0 0.0
      %826 = vmatprep.subr.mxu0 0.0
      %827 = vmatpush2.xpose.msra.mxu0 0.0
      %828 = vmatprep.subr.mxu0 0.0
      %829 = vmatpush2.xpose.msra.mxu0 0.0
      %830 = vmatprep.subr.mxu0 0.0
      %831 = vmatpush2.xpose.msra.mxu0 0.0
      %832 = vmatprep.subr.mxu0 0.0
      %833 = vmatpush2.xpose.msra.mxu0 0.0
      %834 = vmatprep.subr.mxu0 0.0
      %835 = vmatpush2.xpose.msra.mxu0 0.0
      %836 = vmatprep.mubr.f32.mxu0 0.0
      %837 = vmatmul.mubr.f32.gmra.mxu0 %v768
      %v838 = vpop.f32.mrf.mxu0
      %v839 = vadd.f32 %v267, %v838
      %v840 = vpop.f32.mrf.mxu0
      %841 = vdwg.mxu0
      %v842 = vsel %vm271, %v839, -inf
      %843 = vmax.xlane.f32.xlu0 %v842
      %v844 = vpop.xlane.xlu0 %843
      %v845 = vsub.f32 %v839, %v844
      %v846 = vmul.f32 %v845, 1.442695
      %v847 = vpow.pop %v846
      %v848 = vsel %vm271, %v847, 0.0
      %849 = vadd.xlane.f32.xlu0 %v848
      %v850 = vpop.xlane.xlu0 %849
      %v851 = vrcp.pop %v850
      %v852 = vmul.f32 %v847, %v851
      %853 = vrot.lane.b32.xlu0 %v251, 40
      %v854 = vpop.permute.xlu0 %853
      %v857 = vsel %vm271, %v852, 0
      %859 = vmatprep.subr.mxu0 0.0
      %860 = vmatpush1.msra.mxu0 0.0
      %861 = vmatprep.subr.mxu0 0.0
      %862 = vmatpush1.msra.mxu0 0.0
      %863 = vmatprep.subr.mxu0 0.0
      %864 = vmatpush1.msra.mxu0 0.0
      %865 = vmatprep.subr.mxu0 0.0
      %866 = vmatpush1.msra.mxu0 0.0
      %867 = vmatprep.subr.mxu0 0.0
      %868 = vmatpush1.msra.mxu0 0.0
      %869 = vmatprep.subr.mxu0 0.0
      %870 = vmatpush1.msra.mxu0 0.0
      %871 = vmatprep.subr.mxu0 0.0
      %872 = vmatpush1.msra.mxu0 0.0
      %873 = vmatprep.subr.mxu0 0.0
      %874 = vmatpush1.msra.mxu0 0.0
      %875 = vmatprep.subr.mxu0 0.0
      %876 = vmatpush1.msra.mxu0 0.0
      %877 = vmatprep.subr.mxu0 0.0
      %878 = vmatpush1.msra.mxu0 0.0
      %879 = vmatprep.subr.mxu0 0.0
      %880 = vmatpush1.msra.mxu0 0.0
      %881 = vmatprep.subr.mxu0 0.0
      %882 = vmatpush1.msra.mxu0 0.0
      %883 = vmatprep.subr.mxu0 0.0
      %884 = vmatpush1.msra.mxu0 0.0
      %885 = vmatprep.subr.mxu0 0.0
      %886 = vmatpush1.msra.mxu0 0.0
      %887 = vmatprep.subr.mxu0 0.0
      %888 = vmatpush1.msra.mxu0 0.0
      %889 = vmatprep.subr.mxu0 0.0
      %890 = vmatpush1.msra.mxu0 %v854
      %891 = vmatprep.subr.mxu0 0.0
      %892 = vmatpush2.msra.mxu0 0.0
      %893 = vmatprep.subr.mxu0 0.0
      %894 = vmatpush2.msra.mxu0 0.0
      %895 = vmatprep.subr.mxu0 0.0
      %896 = vmatpush2.msra.mxu0 0.0
      %897 = vmatprep.subr.mxu0 0.0
      %898 = vmatpush2.msra.mxu0 0.0
      %899 = vmatprep.subr.mxu0 0.0
      %900 = vmatpush2.msra.mxu0 0.0
      %901 = vmatprep.subr.mxu0 0.0
      %902 = vmatpush2.msra.mxu0 0.0
      %903 = vmatprep.subr.mxu0 0.0
      %904 = vmatpush2.msra.mxu0 0.0
      %905 = vmatprep.subr.mxu0 0.0
      %906 = vmatpush2.msra.mxu0 0.0
      %907 = vmatprep.subr.mxu0 0.0
      %908 = vmatpush2.msra.mxu0 0.0
      %909 = vmatprep.subr.mxu0 0.0
      %910 = vmatpush2.msra.mxu0 0.0
      %911 = vmatprep.subr.mxu0 0.0
      %912 = vmatpush2.msra.mxu0 0.0
      %913 = vmatprep.subr.mxu0 0.0
      %914 = vmatpush2.msra.mxu0 0.0
      %915 = vmatprep.subr.mxu0 0.0
      %916 = vmatpush2.msra.mxu0 0.0
      %917 = vmatprep.subr.mxu0 0.0
      %918 = vmatpush2.msra.mxu0 0.0
      %919 = vmatprep.subr.mxu0 0.0
      %920 = vmatpush2.msra.mxu0 0.0
      %921 = vmatprep.subr.mxu0 0.0
      %922 = vmatpush2.msra.mxu0 0.0
      %923 = vmatprep.mubr.f32.mxu0 0.0
      %924 = vmatmul.mubr.f32.gmra.mxu0 %v857
      %v925 = vpop.f32.mrf.mxu0
      %v926 = vadd.f32 0.0, %v925
      %v927 = vpop.f32.mrf.mxu0
      %928 = vdwg.mxu0
      %930 = vrot.lane.b32.xlu0 %v596, 8
      %v931 = vpop.permute.xlu0 %930
      %934 = vrot.lane.b32.xlu0 %v761, 16
      %v935 = vpop.permute.xlu0 %934
      %938 = vrot.lane.b32.xlu0 %v926, 24
      %v939 = vpop.permute.xlu0 %938
      %v941 = vsel %vm271, %v431, %v931
      %vm942 = vcmask 130048
      %v943 = vsel %vm942, %v941, %v935
      %vm944 = vcmask 195584
      %v945 = vsel %vm944, %v943, %v939
      %v946 = vld [vmem:[%s3] sm:$0xff]
      %v947 = vld [vmem:[%s3 + $0x8] sm:$0xff]
      %v948 = vld [vmem:[%s3 + $0x10] sm:$0xff]
      %v949 = vld [vmem:[%s3 + $0x18] sm:$0xff]
      %v950 = vld [vmem:[%s4] sm:$0x1]
      %v952 = vlaneseq
      %v953 = vshrl.u32 %v952, 7
      %v954 = vsub.s32 0, %v953
      %v955 = vrot.slane %v950, %v954
      %vm957 = vcmask 261120
      %v959 = vsel %vm957, %v945, 0
      %961 = vmatprep.subr.mxu0 0.0
      %962 = vmatpush1.msra.mxu0 0.0
      %963 = vmatprep.subr.mxu0 0.0
      %964 = vmatpush1.msra.mxu0 0.0
      %965 = vmatprep.subr.mxu0 0.0
      %966 = vmatpush1.msra.mxu0 0.0
      %967 = vmatprep.subr.mxu0 0.0
      %968 = vmatpush1.msra.mxu0 0.0
      %969 = vmatprep.subr.mxu0 0.0
      %970 = vmatpush1.msra.mxu0 0.0
      %971 = vmatprep.subr.mxu0 0.0
      %972 = vmatpush1.msra.mxu0 0.0
      %973 = vmatprep.subr.mxu0 0.0
      %974 = vmatpush1.msra.mxu0 0.0
      %975 = vmatprep.subr.mxu0 0.0
      %976 = vmatpush1.msra.mxu0 0.0
      %977 = vmatprep.subr.mxu0 0.0
      %978 = vmatpush1.msra.mxu0 0.0
      %979 = vmatprep.subr.mxu0 0.0
      %980 = vmatpush1.msra.mxu0 0.0
      %981 = vmatprep.subr.mxu0 0.0
      %982 = vmatpush1.msra.mxu0 0.0
      %983 = vmatprep.subr.mxu0 0.0
      %984 = vmatpush1.msra.mxu0 0.0
      %985 = vmatprep.subr.mxu0 0.0
      %986 = vmatpush1.msra.mxu0 %v949
      %987 = vmatprep.subr.mxu0 0.0
      %988 = vmatpush1.msra.mxu0 %v948
      %989 = vmatprep.subr.mxu0 0.0
      %990 = vmatpush1.msra.mxu0 %v947
      %991 = vmatprep.subr.mxu0 0.0
      %992 = vmatpush1.msra.mxu0 %v946
      %993 = vmatprep.subr.mxu0 0.0
      %994 = vmatpush2.msra.mxu0 0.0
      %995 = vmatprep.subr.mxu0 0.0
      %996 = vmatpush2.msra.mxu0 0.0
      %997 = vmatprep.subr.mxu0 0.0
      %998 = vmatpush2.msra.mxu0 0.0
      %999 = vmatprep.subr.mxu0 0.0
      %1000 = vmatpush2.msra.mxu0 0.0
      %1001 = vmatprep.subr.mxu0 0.0
      %1002 = vmatpush2.msra.mxu0 0.0
      %1003 = vmatprep.subr.mxu0 0.0
      %1004 = vmatpush2.msra.mxu0 0.0
      %1005 = vmatprep.subr.mxu0 0.0
      %1006 = vmatpush2.msra.mxu0 0.0
      %1007 = vmatprep.subr.mxu0 0.0
      %1008 = vmatpush2.msra.mxu0 0.0
      %1009 = vmatprep.subr.mxu0 0.0
      %1010 = vmatpush2.msra.mxu0 0.0
      %1011 = vmatprep.subr.mxu0 0.0
      %1012 = vmatpush2.msra.mxu0 0.0
      %1013 = vmatprep.subr.mxu0 0.0
      %1014 = vmatpush2.msra.mxu0 0.0
      %1015 = vmatprep.subr.mxu0 0.0
      %1016 = vmatpush2.msra.mxu0 0.0
      %1017 = vmatprep.subr.mxu0 0.0
      %1018 = vmatpush2.msra.mxu0 0.0
      %1019 = vmatprep.subr.mxu0 0.0
      %1020 = vmatpush2.msra.mxu0 0.0
      %1021 = vmatprep.subr.mxu0 0.0
      %1022 = vmatpush2.msra.mxu0 0.0
      %1023 = vmatprep.subr.mxu0 0.0
      %1024 = vmatpush2.msra.mxu0 0.0
      %1025 = vmatprep.mubr.f32.mxu0 0.0
      %1026 = vmatmul.mubr.f32.gmra.mxu0 %v959
      %v1027 = vpop.f32.mrf.mxu0
      %v1028 = vadd.f32 %v955, %v1027
      %v1029 = vpop.f32.mrf.mxu0
      %1030 = vdwg.mxu0
      %v1031 = vld [vmem:[%s246] sm:$0xff]
      %v1032 = vadd.f32 %v1031, %v1028
      %1033 = vst.msk [vmem:[%s250] sm:$0xff] %vm957, %v1032
      %p1034 = scmp.lt.s32.totalorder %s16, 1
      %s1035 = scalar_select %p1034, %s16, 1
      %s1036 = smul.addr %s1035, 8
      %s1037 = scalar_lea.vmem %s5, %s1036
      // Predicated region
      $region41: #{gpt_geglu_forward.8} parent=39 // pred_check
        %p1038 = pneg %p154
      $region42: #{gpt_geglu_forward.8} parent=39 // pred_check_branch
        %1040 = sbr.rel (%p1038) target = $region44
      $region43: #{gpt_geglu_forward.8} parent=39 // pred_region
        _
      $region44: #{gpt_geglu_forward.8} parent=39 // pred_fallthru
        _
    $region40: #{gpt_geglu_forward.8} parent=5 // pred_fallthru
      _
    %p1041 = scmp.le.s32.totalorder 2, %s11
    // Predicated region
    $region45: #{gpt_geglu_forward.8} parent=5 // pred_check
      %p1042 = pneg %p1041
    $region46: #{gpt_geglu_forward.8} parent=5 // pred_check_branch
      %1044 = sbr.rel (%p1042) target = $region48
    $region47: #{gpt_geglu_forward.8} parent=5 // pred_region
      %s1045 = ssub.s32 %s11, 2
      // Predicated region
      $region49: #{gpt_geglu_forward.8} parent=47 // pred_check
        %p1046 = pneg %p160
      $region50: #{gpt_geglu_forward.8} parent=47 // pred_check_branch
        %1048 = sbr.rel (%p1046) target = $region52
      $region51: #{gpt_geglu_forward.8} parent=47 // pred_region
        %p1049 = scmp.lt.s32.totalorder %s17, 1
        %s1050 = scalar_select %p1049, %s17, 1
        %s1051 = smul.addr %s1050, 8
        %s1052 = scalar_lea.vmem %s5, %s1051
      $region52: #{gpt_geglu_forward.8} parent=47 // pred_fallthru
        _
    $region48: #{gpt_geglu_forward.8} parent=5 // pred_fallthru
      _
  $region6: #{gpt_geglu_forward.8} parent=0 // loop_footer
    %s15 = sadd.s32 1, %s11
  $region7: #{gpt_geglu_forward.8} parent=0 // loop_footer_branch
    %10 = sbr.rel target = $region3
  $region8: #{gpt_geglu_forward.8} parent=0 // loop_exit
    _

// kernel: gpt_geglu_forward.9
$region0: #{gpt_geglu_forward.9}
  #allocation0 [shape = 'u32[]', space=smem, size = 0x4, offset = 0x4, fixed_abs, tag = 'smem constant byte address 0x4 - core index']
  #allocation1 [shape = 'u32[144,128]{1,0:T(1,128)}', space=vmem, size = 0x12000, scoped, tag = 'internal scratch']
  #allocation2 [shape = 'f32[16,32]{1,0:T(8,128)}', space=vmem, size = 0x2000, scoped, tag = 'scratch operand']
  #allocation3 [shape = 'f32[16,32]{1,0:T(8,128)}', space=vmem, size = 0x2000, scoped, tag = 'scratch operand']
  %s0 = inlined_call_operand.vmem [shape: f32[16,32], index: 0, kind: input, shape index: {}]
  %s1 = inlined_call_operand.vmem [shape: f32[1,32], index: 1, kind: input, shape index: {}]
  %s2 = inlined_call_operand.vmem [shape: f32[1,32], index: 2, kind: input, shape index: {}]
  %s3 = inlined_call_operand.vmem [shape: f32[32,128], index: 3, kind: input, shape index: {}]
  %s4 = inlined_call_operand.vmem [shape: f32[1,128], index: 4, kind: input, shape index: {}]
  %s5 = inlined_call_operand.vmem [shape: f32[32,128], index: 5, kind: input, shape index: {}]
  %s6 = inlined_call_operand.vmem [shape: f32[1,128], index: 6, kind: input, shape index: {}]
  %s7 = inlined_call_operand.vmem [shape: f32[128,32], index: 7, kind: input, shape index: {}]
  %s8 = inlined_call_operand.vmem [shape: f32[1,32], index: 8, kind: input, shape index: {}]
  %s9 = inlined_call_operand.vmem [shape: f32[16,32], index: 9, kind: output, shape index: {}]
  %s10 = sld [smem:[#allocation0]]
  $region54: #{gpt_geglu_forward.9} parent=0
    _
  %s12 = ssub.s32 1, %s10
  %s13 = scalar_select 0, %s12, %s10
  // Predicated region
  $region2: #{gpt_geglu_forward.9} parent=0 // pred_check
    _
  $region3: #{gpt_geglu_forward.9} parent=0 // pred_check_branch
    %15 = sbr.rel (0) target = $region5
  $region4: #{gpt_geglu_forward.9} parent=0 // pred_region
    _
  $region5: #{gpt_geglu_forward.9} parent=0 // pred_fallthru
    _
  // Predicated region
  $region6: #{gpt_geglu_forward.9} parent=0 // pred_check
    _
  $region7: #{gpt_geglu_forward.9} parent=0 // pred_check_branch
    %17 = sbr.rel (0) target = $region9
  $region8: #{gpt_geglu_forward.9} parent=0 // pred_region
    _
  $region9: #{gpt_geglu_forward.9} parent=0 // pred_fallthru
    _
  // Predicated region
  $region10: #{gpt_geglu_forward.9} parent=0 // pred_check
    _
  $region11: #{gpt_geglu_forward.9} parent=0 // pred_check_branch
    %19 = sbr.rel (0) target = $region13
  $region12: #{gpt_geglu_forward.9} parent=0 // pred_region
    _
  $region13: #{gpt_geglu_forward.9} parent=0 // pred_fallthru
    _
  // Predicated region
  $region14: #{gpt_geglu_forward.9} parent=0 // pred_check
    _
  $region15: #{gpt_geglu_forward.9} parent=0 // pred_check_branch
    %21 = sbr.rel (0) target = $region17
  $region16: #{gpt_geglu_forward.9} parent=0 // pred_region
    _
  $region17: #{gpt_geglu_forward.9} parent=0 // pred_fallthru
    _
  // Predicated region
  $region18: #{gpt_geglu_forward.9} parent=0 // pred_check
    _
  $region19: #{gpt_geglu_forward.9} parent=0 // pred_check_branch
    %23 = sbr.rel (0) target = $region21
  $region20: #{gpt_geglu_forward.9} parent=0 // pred_region
    _
  $region21: #{gpt_geglu_forward.9} parent=0 // pred_fallthru
    _
  // Predicated region
  $region22: #{gpt_geglu_forward.9} parent=0 // pred_check
    _
  $region23: #{gpt_geglu_forward.9} parent=0 // pred_check_branch
    %25 = sbr.rel (0) target = $region25
  $region24: #{gpt_geglu_forward.9} parent=0 // pred_region
    _
  $region25: #{gpt_geglu_forward.9} parent=0 // pred_fallthru
    _
  // Predicated region
  $region26: #{gpt_geglu_forward.9} parent=0 // pred_check
    _
  $region27: #{gpt_geglu_forward.9} parent=0 // pred_check_branch
    %27 = sbr.rel (0) target = $region29
  $region28: #{gpt_geglu_forward.9} parent=0 // pred_region
    _
  $region29: #{gpt_geglu_forward.9} parent=0 // pred_fallthru
    _
  // Predicated region
  $region30: #{gpt_geglu_forward.9} parent=0 // pred_check
    _
  $region31: #{gpt_geglu_forward.9} parent=0 // pred_check_branch
    %29 = sbr.rel (0) target = $region33
  $region32: #{gpt_geglu_forward.9} parent=0 // pred_region
    _
  $region33: #{gpt_geglu_forward.9} parent=0 // pred_fallthru
    _
  // Predicated region
  $region34: #{gpt_geglu_forward.9} parent=0 // pred_check
    _
  $region35: #{gpt_geglu_forward.9} parent=0 // pred_check_branch
    %31 = sbr.rel (0) target = $region37
  $region36: #{gpt_geglu_forward.9} parent=0 // pred_region
    _
  $region37: #{gpt_geglu_forward.9} parent=0 // pred_fallthru
    _
  %p32 = scmp.eq.s32.totalorder 0, 0
  // Predicated region
  $region38: #{gpt_geglu_forward.9} parent=0 // pred_check
    %p33 = pneg %p32
  $region39: #{gpt_geglu_forward.9} parent=0 // pred_check_branch
    %35 = sbr.rel (%p33) target = $region41
  $region40: #{gpt_geglu_forward.9} parent=0 // pred_region
    %v36 = vld [vmem:[%s0] sm:$0xff]
    %v37 = vld [vmem:[%s0 + $0x8] sm:$0xff]
    %vm38 = vcmask 261120
    %v39 = vsel %vm38, %v36, 0.0
    %40 = vadd.xlane.f32.xlu0 %v39
    %v41 = vpop.xlane.xlu0 %40
    %v42 = vsel %vm38, %v37, 0.0
    %43 = vadd.xlane.f32.xlu0 %v42
    %v44 = vpop.xlane.xlu0 %43
    %v45 = vrcp.pop 32.0
    %v46 = vmul.f32 %v41, %v45
    %v47 = vmul.f32 %v44, %v45
    %v48 = vsub.f32 %v36, %v46
    %v49 = vsub.f32 %v37, %v47
    %v50 = vmul.f32 %v48, %v48
    %v51 = vmul.f32 %v49, %v49
    %v52 = vsel %vm38, %v50, 0.0
    %53 = vadd.xlane.f32.xlu0 %v52
    %v54 = vpop.xlane.xlu0 %53
    %v55 = vsel %vm38, %v51, 0.0
    %56 = vadd.xlane.f32.xlu0 %v55
    %v57 = vpop.xlane.xlu0 %56
    %v58 = vmul.f32 %v54, %v45
    %v59 = vmul.f32 %v57, %v45
    %v60 = vadd.f32 %v58, 1e-05
    %v61 = vadd.f32 %v59, 1e-05
    %v62 = vrsqrt.pop %v60
    %v63 = vrsqrt.pop %v61
    %v64 = vmul.f32 %v48, %v62
    %v65 = vmul.f32 %v49, %v63
    %v66 = vld [vmem:[%s1] sm:$0x1]
    %v68 = vlaneseq
    %v69 = vshrl.u32 %v68, 7
    %v70 = vsub.s32 0, %v69
    %v71 = vrot.slane %v66, %v70
    %v73 = vmul.f32 %v64, %v71
    %v74 = vmul.f32 %v65, %v71
    %v75 = vld [vmem:[%s2] sm:$0x1]
    %v77 = vlaneseq
    %v78 = vshrl.u32 %v77, 7
    %v79 = vsub.s32 0, %v78
    %v80 = vrot.slane %v75, %v79
    %v82 = vadd.f32 %v73, %v80
    %v83 = vadd.f32 %v74, %v80
    %84 = vst.msk [vmem:[#allocation2] sm:$0xff] %vm38, %v82
    %85 = vst.msk [vmem:[#allocation2 + $0x8] sm:$0xff] %vm38, %v83
    %v86 = vld [vmem:[%s8] sm:$0x1]
    %v88 = vlaneseq
    %v89 = vshrl.u32 %v88, 7
    %v90 = vsub.s32 0, %v89
    %v91 = vrot.slane %v86, %v90
    %v93 = vadd.f32 %v36, %v91
    %v94 = vadd.f32 %v37, %v91
    %95 = vst.msk [vmem:[#allocation3] sm:$0xff] %vm38, %v93
    %96 = vst.msk [vmem:[#allocation3 + $0x8] sm:$0xff] %vm38, %v94
  $region41: #{gpt_geglu_forward.9} parent=0 // pred_fallthru
    _
  %v97 = vld [vmem:[#allocation2] sm:$0xff]
  %v98 = vld [vmem:[#allocation2 + $0x8] sm:$0xff]
  %v99 = vld [vmem:[%s3] sm:$0xff]
  %v100 = vld [vmem:[%s3 + $0x8] sm:$0xff]
  %v101 = vld [vmem:[%s3 + $0x10] sm:$0xff]
  %v102 = vld [vmem:[%s3 + $0x18] sm:$0xff]
  %v103 = vld [vmem:[%s4] sm:$0x1]
  %v105 = vlaneseq
  %v106 = vshrl.u32 %v105, 7
  %v107 = vsub.s32 0, %v106
  %v108 = vrot.slane %v103, %v107
  %vm110 = vcmask 261120
  %v112 = vsel %vm110, %v97, 0
  %v115 = vsel %vm110, %v98, 0
  %117 = vmatprep.subr.mxu0 0.0
  %118 = vmatpush1.msra.mxu0 0.0
  %119 = vmatprep.subr.mxu0 0.0
  %120 = vmatpush1.msra.mxu0 0.0
  %121 = vmatprep.subr.mxu0 0.0
  %122 = vmatpush1.msra.mxu0 0.0
  %123 = vmatprep.subr.mxu0 0.0
  %124 = vmatpush1.msra.mxu0 0.0
  %125 = vmatprep.subr.mxu0 0.0
  %126 = vmatpush1.msra.mxu0 0.0
  %127 = vmatprep.subr.mxu0 0.0
  %128 = vmatpush1.msra.mxu0 0.0
  %129 = vmatprep.subr.mxu0 0.0
  %130 = vmatpush1.msra.mxu0 0.0
  %131 = vmatprep.subr.mxu0 0.0
  %132 = vmatpush1.msra.mxu0 0.0
  %133 = vmatprep.subr.mxu0 0.0
  %134 = vmatpush1.msra.mxu0 0.0
  %135 = vmatprep.subr.mxu0 0.0
  %136 = vmatpush1.msra.mxu0 0.0
  %137 = vmatprep.subr.mxu0 0.0
  %138 = vmatpush1.msra.mxu0 0.0
  %139 = vmatprep.subr.mxu0 0.0
  %140 = vmatpush1.msra.mxu0 0.0
  %141 = vmatprep.subr.mxu0 0.0
  %142 = vmatpush1.msra.mxu0 %v102
  %143 = vmatprep.subr.mxu0 0.0
  %144 = vmatpush1.msra.mxu0 %v101
  %145 = vmatprep.subr.mxu0 0.0
  %146 = vmatpush1.msra.mxu0 %v100
  %147 = vmatprep.subr.mxu0 0.0
  %148 = vmatpush1.msra.mxu0 %v99
  %149 = vmatprep.subr.mxu0 0.0
  %150 = vmatpush2.msra.mxu0 0.0
  %151 = vmatprep.subr.mxu0 0.0
  %152 = vmatpush2.msra.mxu0 0.0
  %153 = vmatprep.subr.mxu0 0.0
  %154 = vmatpush2.msra.mxu0 0.0
  %155 = vmatprep.subr.mxu0 0.0
  %156 = vmatpush2.msra.mxu0 0.0
  %157 = vmatprep.subr.mxu0 0.0
  %158 = vmatpush2.msra.mxu0 0.0
  %159 = vmatprep.subr.mxu0 0.0
  %160 = vmatpush2.msra.mxu0 0.0
  %161 = vmatprep.subr.mxu0 0.0
  %162 = vmatpush2.msra.mxu0 0.0
  %163 = vmatprep.subr.mxu0 0.0
  %164 = vmatpush2.msra.mxu0 0.0
  %165 = vmatprep.subr.mxu0 0.0
  %166 = vmatpush2.msra.mxu0 0.0
  %167 = vmatprep.subr.mxu0 0.0
  %168 = vmatpush2.msra.mxu0 0.0
  %169 = vmatprep.subr.mxu0 0.0
  %170 = vmatpush2.msra.mxu0 0.0
  %171 = vmatprep.subr.mxu0 0.0
  %172 = vmatpush2.msra.mxu0 0.0
  %173 = vmatprep.subr.mxu0 0.0
  %174 = vmatpush2.msra.mxu0 0.0
  %175 = vmatprep.subr.mxu0 0.0
  %176 = vmatpush2.msra.mxu0 0.0
  %177 = vmatprep.subr.mxu0 0.0
  %178 = vmatpush2.msra.mxu0 0.0
  %179 = vmatprep.subr.mxu0 0.0
  %180 = vmatpush2.msra.mxu0 0.0
  %181 = vmatprep.mubr.f32.mxu0 0.0
  %182 = vmatmul.mubr.f32.gmra.mxu0 %v112
  %v183 = vpop.f32.mrf.mxu0
  %v184 = vadd.f32 %v108, %v183
  %v185 = vpop.f32.mrf.mxu0
  %186 = vmatprep.mubr.f32.mxu0 0.0
  %187 = vmatmul.mubr.f32.gmra.mxu0 %v115
  %v188 = vpop.f32.mrf.mxu0
  %v189 = vadd.f32 %v108, %v188
  %v190 = vpop.f32.mrf.mxu0
  %191 = vdwg.mxu0
  %v192 = vld [vmem:[%s5] sm:$0xff]
  %v193 = vld [vmem:[%s5 + $0x8] sm:$0xff]
  %v194 = vld [vmem:[%s5 + $0x10] sm:$0xff]
  %v195 = vld [vmem:[%s5 + $0x18] sm:$0xff]
  %v196 = vld [vmem:[%s6] sm:$0x1]
  %v198 = vlaneseq
  %v199 = vshrl.u32 %v198, 7
  %v200 = vsub.s32 0, %v199
  %v201 = vrot.slane %v196, %v200
  %203 = vmatprep.subr.mxu0 0.0
  %204 = vmatpush1.msra.mxu0 0.0
  %205 = vmatprep.subr.mxu0 0.0
  %206 = vmatpush1.msra.mxu0 0.0
  %207 = vmatprep.subr.mxu0 0.0
  %208 = vmatpush1.msra.mxu0 0.0
  %209 = vmatprep.subr.mxu0 0.0
  %210 = vmatpush1.msra.mxu0 0.0
  %211 = vmatprep.subr.mxu0 0.0
  %212 = vmatpush1.msra.mxu0 0.0
  %213 = vmatprep.subr.mxu0 0.0
  %214 = vmatpush1.msra.mxu0 0.0
  %215 = vmatprep.subr.mxu0 0.0
  %216 = vmatpush1.msra.mxu0 0.0
  %217 = vmatprep.subr.mxu0 0.0
  %218 = vmatpush1.msra.mxu0 0.0
  %219 = vmatprep.subr.mxu0 0.0
  %220 = vmatpush1.msra.mxu0 0.0
  %221 = vmatprep.subr.mxu0 0.0
  %222 = vmatpush1.msra.mxu0 0.0
  %223 = vmatprep.subr.mxu0 0.0
  %224 = vmatpush1.msra.mxu0 0.0
  %225 = vmatprep.subr.mxu0 0.0
  %226 = vmatpush1.msra.mxu0 0.0
  %227 = vmatprep.subr.mxu0 0.0
  %228 = vmatpush1.msra.mxu0 %v195
  %229 = vmatprep.subr.mxu0 0.0
  %230 = vmatpush1.msra.mxu0 %v194
  %231 = vmatprep.subr.mxu0 0.0
  %232 = vmatpush1.msra.mxu0 %v193
  %233 = vmatprep.subr.mxu0 0.0
  %234 = vmatpush1.msra.mxu0 %v192
  %235 = vmatprep.subr.mxu0 0.0
  %236 = vmatpush2.msra.mxu0 0.0
  %237 = vmatprep.subr.mxu0 0.0
  %238 = vmatpush2.msra.mxu0 0.0
  %239 = vmatprep.subr.mxu0 0.0
  %240 = vmatpush2.msra.mxu0 0.0
  %241 = vmatprep.subr.mxu0 0.0
  %242 = vmatpush2.msra.mxu0 0.0
  %243 = vmatprep.subr.mxu0 0.0
  %244 = vmatpush2.msra.mxu0 0.0
  %245 = vmatprep.subr.mxu0 0.0
  %246 = vmatpush2.msra.mxu0 0.0
  %247 = vmatprep.subr.mxu0 0.0
  %248 = vmatpush2.msra.mxu0 0.0
  %249 = vmatprep.subr.mxu0 0.0
  %250 = vmatpush2.msra.mxu0 0.0
  %251 = vmatprep.subr.mxu0 0.0
  %252 = vmatpush2.msra.mxu0 0.0
  %253 = vmatprep.subr.mxu0 0.0
  %254 = vmatpush2.msra.mxu0 0.0
  %255 = vmatprep.subr.mxu0 0.0
  %256 = vmatpush2.msra.mxu0 0.0
  %257 = vmatprep.subr.mxu0 0.0
  %258 = vmatpush2.msra.mxu0 0.0
  %259 = vmatprep.subr.mxu0 0.0
  %260 = vmatpush2.msra.mxu0 0.0
  %261 = vmatprep.subr.mxu0 0.0
  %262 = vmatpush2.msra.mxu0 0.0
  %263 = vmatprep.subr.mxu0 0.0
  %264 = vmatpush2.msra.mxu0 0.0
  %265 = vmatprep.subr.mxu0 0.0
  %266 = vmatpush2.msra.mxu0 0.0
  %267 = vmatprep.mubr.f32.mxu0 0.0
  %268 = vmatmul.mubr.f32.gmra.mxu0 %v112
  %v269 = vpop.f32.mrf.mxu0
  %v270 = vadd.f32 %v201, %v269
  %v271 = vpop.f32.mrf.mxu0
  %272 = vmatprep.mubr.f32.mxu0 0.0
  %273 = vmatmul.mubr.f32.gmra.mxu0 %v115
  %v274 = vpop.f32.mrf.mxu0
  %v275 = vadd.f32 %v201, %v274
  %v276 = vpop.f32.mrf.mxu0
  %277 = vdwg.mxu0
  %v278 = vmul.f32 %v184, 0.5
  %v279 = vmul.f32 %v189, 0.5
  %v280 = vmul.f32 %v184, 0.044715
  %v281 = vmul.f32 %v189, 0.044715
  %v282 = vmul.f32 %v280, %v184
  %v283 = vmul.f32 %v281, %v189
  %v284 = vmul.f32 %v282, %v184
  %v285 = vmul.f32 %v283, %v189
  %v286 = vadd.f32 %v184, %v284
  %v287 = vadd.f32 %v189, %v285
  %v288 = vmul.f32 %v286, 0.7978846
  %v289 = vmul.f32 %v287, 0.7978846
  %v290 = vtanh.pop %v288
  %v291 = vtanh.pop %v289
  %v292 = vadd.f32 %v290, 1.0
  %v293 = vadd.f32 %v291, 1.0
  %v294 = vmul.f32 %v278, %v292
  %v295 = vmul.f32 %v279, %v293
  %v296 = vld [vmem:[#allocation3] sm:$0xff]
  %v297 = vld [vmem:[#allocation3 + $0x8] sm:$0xff]
  %v298 = vmul.f32 %v294, %v270
  %v299 = vmul.f32 %v295, %v275
  %v300 = vld [vmem:[%s7] sm:$0xff]
  %v301 = vld [vmem:[%s7 + $0x8] sm:$0xff]
  %v302 = vld [vmem:[%s7 + $0x10] sm:$0xff]
  %v303 = vld [vmem:[%s7 + $0x18] sm:$0xff]
  %v304 = vld [vmem:[%s7 + $0x20] sm:$0xff]
  %v305 = vld [vmem:[%s7 + $0x28] sm:$0xff]
  %v306 = vld [vmem:[%s7 + $0x30] sm:$0xff]
  %v307 = vld [vmem:[%s7 + $0x38] sm:$0xff]
  %v308 = vld [vmem:[%s7 + $0x40] sm:$0xff]
  %v309 = vld [vmem:[%s7 + $0x48] sm:$0xff]
  %v310 = vld [vmem:[%s7 + $0x50] sm:$0xff]
  %v311 = vld [vmem:[%s7 + $0x58] sm:$0xff]
  %v312 = vld [vmem:[%s7 + $0x60] sm:$0xff]
  %v313 = vld [vmem:[%s7 + $0x68] sm:$0xff]
  %v314 = vld [vmem:[%s7 + $0x70] sm:$0xff]
  %v315 = vld [vmem:[%s7 + $0x78] sm:$0xff]
  %316 = vmatprep.subr.mxu0 0.0
  %317 = vmatpush1.msra.mxu0 %v315
  %318 = vmatprep.subr.mxu0 0.0
  %319 = vmatpush1.msra.mxu0 %v314
  %320 = vmatprep.subr.mxu0 0.0
  %321 = vmatpush1.msra.mxu0 %v313
  %322 = vmatprep.subr.mxu0 0.0
  %323 = vmatpush1.msra.mxu0 %v312
  %324 = vmatprep.subr.mxu0 0.0
  %325 = vmatpush1.msra.mxu0 %v311
  %326 = vmatprep.subr.mxu0 0.0
  %327 = vmatpush1.msra.mxu0 %v310
  %328 = vmatprep.subr.mxu0 0.0
  %329 = vmatpush1.msra.mxu0 %v309
  %330 = vmatprep.subr.mxu0 0.0
  %331 = vmatpush1.msra.mxu0 %v308
  %332 = vmatprep.subr.mxu0 0.0
  %333 = vmatpush1.msra.mxu0 %v307
  %334 = vmatprep.subr.mxu0 0.0
  %335 = vmatpush1.msra.mxu0 %v306
  %336 = vmatprep.subr.mxu0 0.0
  %337 = vmatpush1.msra.mxu0 %v305
  %338 = vmatprep.subr.mxu0 0.0
  %339 = vmatpush1.msra.mxu0 %v304
  %340 = vmatprep.subr.mxu0 0.0
  %341 = vmatpush1.msra.mxu0 %v303
  %342 = vmatprep.subr.mxu0 0.0
  %343 = vmatpush1.msra.mxu0 %v302
  %344 = vmatprep.subr.mxu0 0.0
  %345 = vmatpush1.msra.mxu0 %v301
  %346 = vmatprep.subr.mxu0 0.0
  %347 = vmatpush1.msra.mxu0 %v300
  %348 = vmatprep.subr.mxu0 0.0
  %349 = vmatpush2.msra.mxu0 0.0
  %350 = vmatprep.subr.mxu0 0.0
  %351 = vmatpush2.msra.mxu0 0.0
  %352 = vmatprep.subr.mxu0 0.0
  %353 = vmatpush2.msra.mxu0 0.0
  %354 = vmatprep.subr.mxu0 0.0
  %355 = vmatpush2.msra.mxu0 0.0
  %356 = vmatprep.subr.mxu0 0.0
  %357 = vmatpush2.msra.mxu0 0.0
  %358 = vmatprep.subr.mxu0 0.0
  %359 = vmatpush2.msra.mxu0 0.0
  %360 = vmatprep.subr.mxu0 0.0
  %361 = vmatpush2.msra.mxu0 0.0
  %362 = vmatprep.subr.mxu0 0.0
  %363 = vmatpush2.msra.mxu0 0.0
  %364 = vmatprep.subr.mxu0 0.0
  %365 = vmatpush2.msra.mxu0 0.0
  %366 = vmatprep.subr.mxu0 0.0
  %367 = vmatpush2.msra.mxu0 0.0
  %368 = vmatprep.subr.mxu0 0.0
  %369 = vmatpush2.msra.mxu0 0.0
  %370 = vmatprep.subr.mxu0 0.0
  %371 = vmatpush2.msra.mxu0 0.0
  %372 = vmatprep.subr.mxu0 0.0
  %373 = vmatpush2.msra.mxu0 0.0
  %374 = vmatprep.subr.mxu0 0.0
  %375 = vmatpush2.msra.mxu0 0.0
  %376 = vmatprep.subr.mxu0 0.0
  %377 = vmatpush2.msra.mxu0 0.0
  %378 = vmatprep.subr.mxu0 0.0
  %379 = vmatpush2.msra.mxu0 0.0
  %380 = vmatprep.mubr.f32.mxu0 0.0
  %381 = vmatmul.mubr.f32.gmra.mxu0 %v298
  %v382 = vpop.f32.mrf.mxu0
  %v383 = vadd.f32 0.0, %v382
  %v384 = vpop.f32.mrf.mxu0
  %385 = vmatprep.mubr.f32.mxu0 0.0
  %386 = vmatmul.mubr.f32.gmra.mxu0 %v299
  %v387 = vpop.f32.mrf.mxu0
  %v388 = vadd.f32 0.0, %v387
  %v389 = vpop.f32.mrf.mxu0
  %390 = vdwg.mxu0
  %v391 = vadd.f32 %v296, %v383
  %v392 = vadd.f32 %v297, %v388
  %393 = vst.msk [vmem:[#allocation3] sm:$0xff] %vm110, %v391
  %394 = vst.msk [vmem:[#allocation3 + $0x8] sm:$0xff] %vm110, %v392
  // Predicated region
  $region42: #{gpt_geglu_forward.9} parent=0 // pred_check
    %p395 = pneg %p32
  $region43: #{gpt_geglu_forward.9} parent=0 // pred_check_branch
    %397 = sbr.rel (%p395) target = $region45
  $region44: #{gpt_geglu_forward.9} parent=0 // pred_region
    %v398 = vld [vmem:[#allocation3] sm:$0xff]
    %v399 = vld [vmem:[#allocation3 + $0x8] sm:$0xff]
    %400 = vst.msk [vmem:[%s9] sm:$0xff] %vm110, %v398
    %401 = vst.msk [vmem:[%s9 + $0x8] sm:$0xff] %vm110, %v399
  $region45: #{gpt_geglu_forward.9} parent=0 // pred_fallthru
    _
  // Predicated region
  $region46: #{gpt_geglu_forward.9} parent=0 // pred_check
    _
  $region47: #{gpt_geglu_forward.9} parent=0 // pred_check_branch
    %403 = sbr.rel (0) target = $region49
  $region48: #{gpt_geglu_forward.9} parent=0 // pred_region
    _
  $region49: #{gpt_geglu_forward.9} parent=0 // pred_fallthru
    _
  // Predicated region
  $region50: #{gpt_geglu_forward.9} parent=0 // pred_check
    _
  $region51: #{gpt_geglu_forward.9} parent=0 // pred_check_branch
    %405 = sbr.rel (0) target = $region53
  $region52: #{gpt_geglu_forward.9} parent=0 // pred_region
    _
  $region53: #{gpt_geglu_forward.9} parent=0 // pred_fallthru
    _

</llo_original>
